<compile_context>
chip_gen: v6e
topology: v6e:2x2x1
jax: 0.10.0
libtpu: 0.0.40
codegen_flags: <defaults>
</compile_context>

<pallas_src>
import functools

import jax
import jax.numpy as jnp
from jax import lax
from jax.experimental import pallas as pl
from jax.experimental.pallas import tpu as pltpu


def _mlp_kernel(out_dims, n_chunks, chunk_b, x_ref, *refs):
    """Fused MLP on one batch block.

    refs = (w0, ..., w_last, b_packed_ref, o_ref)
      x_ref    : (tile_b, n_input)    natural (batch, feature) layout
      w_i      : (out_i, in_i)        PyTorch nn.Linear weight layout
      b_packed : (max_out, n_layers)  column j = bias of layer j (zero-padded)
      o_ref    : (n_output, tile_b)   batch on the lane axis (lane-dense store)
    Accumulation is always f32; x / weights may be bf16 on v6e/v7x.
    """
    o_ref = refs[-1]
    b_ref = refs[-2]
    w_refs = refs[:-2]
    n_layers = len(w_refs)

    # Hoist weight loads and bias column slices out of the chunk loop.
    ws = [w_ref[...] for w_ref in w_refs]
    b_cols = [b_ref[0:out_dims[l], l:l + 1] for l in range(n_layers)]

    # Fully static (Python-unrolled) inner loop over batch chunks: every slice
    # offset is a compile-time constant, each chunk's activations die right
    # after its lane-dense store.
    for c in range(n_chunks):
        lo = c * chunk_b
        hi = lo + chunk_b
        xc = x_ref[lo:hi, :]                       # (chunk_b, n_in), batch on sublanes

        h = None
        for layer in range(n_layers):
            w = ws[layer]
            if layer == 0:
                # W0 (out, in) . xc (chunk_b, in) contracted on the last dims:
                # result (out, chunk_b) -- batch moves onto the lane axis with
                # no explicit transpose (MXU transposed-operand path).
                h = lax.dot_general(
                    w, xc.astype(w.dtype),
                    dimension_numbers=(((1,), (1,)), ((), ())),
                    preferred_element_type=jnp.float32)
            else:
                h = jnp.dot(w, h.astype(w.dtype),
                            preferred_element_type=jnp.float32)
            h = h + b_cols[layer]                  # f32 bias, broadcast over lanes
            if layer < n_layers - 1:               # hidden layers only
                h = jnp.maximum(h, 0.0)            # f32 ReLU epilogue (v5e-safe)

        o_ref[:, lo:hi] = h.astype(o_ref.dtype)    # lane-dense store


def neural_net_forward(x, params, *, tile_b=4096, chunk_b=512,
                       compute_dtype=None, x_buffer_count=None):
    """Fused NeuralNet forward as a single Pallas TPU kernel.

    x:      (batch, n_input)
    params: list of (W, b), PyTorch nn.Linear layout: W (out, in), b (out,).
            Hidden layers first, output layer last.
    compute_dtype: optional (e.g. jnp.bfloat16 on v6e/v7x) — casts x and the
            weights for MXU-friendly I/O; accumulation / bias / ReLU stay f32.
    x_buffer_count: optional pipeline depth for the x input (e.g. 3 on v7x).
    """
    if compute_dtype is not None:
        x = x.astype(compute_dtype)
        params = [(w.astype(compute_dtype), b) for w, b in params]

    batch, n_in = x.shape
    weights = [w for w, _ in params]
    out_dims = tuple(int(w.shape[0]) for w in weights)
    n_output = out_dims[-1]
    n_layers = len(weights)

    # ---- batch tiling --------------------------------------------------
    chunk_b = max(128, (int(chunk_b) // 128) * 128)        # inner chunk, 128-mult
    tile_b = max(chunk_b, (int(tile_b) // chunk_b) * chunk_b)
    if batch > chunk_b:
        # Cap the block so there are >= 2 grid steps: v7x's two TensorCores
        # each get work on the "parallel" batch axis.
        per_half = pl.cdiv(pl.cdiv(batch, 2), chunk_b) * chunk_b
        tile_b = min(tile_b, per_half)
    else:
        tile_b = chunk_b
    n_chunks = tile_b // chunk_b
    grid = (pl.cdiv(batch, tile_b),)                       # partial last block masked

    # One packed f32 bias slab instead of n_layers tiny (1, out) inputs.
    max_out = max(out_dims)
    b_cols = [
        jnp.pad(b.astype(jnp.float32).reshape(-1, 1),
                ((0, max_out - b.shape[0]), (0, 0)))
        for _, b in params
    ]
    b_packed = jnp.concatenate(b_cols, axis=1)             # (max_out, n_layers)

    kernel = functools.partial(_mlp_kernel, out_dims, n_chunks, chunk_b)

    if x_buffer_count is None:
        x_spec = pl.BlockSpec((tile_b, n_in), lambda i: (i, 0))
    else:
        x_spec = pl.BlockSpec((tile_b, n_in), lambda i: (i, 0),
                              pipeline_mode=pl.Buffered(int(x_buffer_count)))
    w_specs = [pl.BlockSpec(w.shape, lambda i: (0, 0)) for w in weights]  # VMEM-resident
    b_spec = pl.BlockSpec(b_packed.shape, lambda i: (0, 0))
    o_spec = pl.BlockSpec((n_output, tile_b), lambda i: (0, i))           # lane-dense

    flops = 2 * grid[0] * tile_b * sum(int(w.shape[0]) * int(w.shape[1])
                                       for w in weights)
    bytes_accessed = (
        x.size * x.dtype.itemsize
        + sum(w.size * w.dtype.itemsize for w in weights)
        + b_packed.size * b_packed.dtype.itemsize
        + n_output * batch * x.dtype.itemsize
    )

    out_t = pl.pallas_call(
        kernel,
        out_shape=jax.ShapeDtypeStruct((n_output, batch), x.dtype),
        grid=grid,
        in_specs=[x_spec] + w_specs + [b_spec],
        out_specs=o_spec,
        compiler_params=pltpu.CompilerParams(
            # batch blocks are independent -> shard across v7x's 2 TensorCores
            dimension_semantics=("parallel",),
        ),
        cost_estimate=pl.CostEstimate(
            flops=flops, transcendentals=0, bytes_accessed=bytes_accessed),
    )(x, *weights, b_packed)

    return out_t.T                                          # (batch, n_output)


def init_params(key, n_input, n_units, n_hidden_layers, n_output):
    """PyTorch-style (uniform +-1/sqrt(fan_in)) init, nn.Linear layout W:(out,in), b:(out,)."""
    params = []
    in_dim = n_input
    dims = [n_units] * n_hidden_layers + [n_output]
    for out_dim in dims:
        key, kw, kb = jax.random.split(key, 3)
        bound = 1.0 / (in_dim ** 0.5)
        w = jax.random.uniform(kw, (out_dim, in_dim), jnp.float32, -bound, bound)
        b = jax.random.uniform(kb, (out_dim,), jnp.float32, -bound, bound)
        params.append((w, b))
        in_dim = out_dim
    return params


def reference_forward(x, params):
    h = x
    for i, (w, b) in enumerate(params):
        h = h @ w.T + b
        if i < len(params) - 1:
            h = jnp.maximum(h, 0.0)
    return h


if __name__ == "__main__":
    # Module config: n_output=8, n_hidden_layers=4, n_units=32, activation=ReLU.
    n_input = 16
    n_units = 32
    n_hidden_layers = 4
    n_output = 8
    batch = 1280   # -> tile_b=1024: 2-step grid, 2 inner chunks, partial last block

    key = jax.random.PRNGKey(0)
    kx, kp = jax.random.split(key)
    x = jax.random.normal(kx, (batch, n_input), jnp.float32)
    params = init_params(kp, n_input, n_units, n_hidden_layers, n_output)

    out = neural_net_forward(x, params)
    out = jax.block_until_ready(out)

    ref = reference_forward(x, params)
    assert out.shape == (batch, n_output)
    err = float(jnp.max(jnp.abs(out - ref)))
    assert jnp.allclose(out, ref, atol=1e-4, rtol=1e-4), err

    print("KERNEL_OK")
</pallas_src>

<mosaic_0001>
module attributes {stable_mosaic.version = 11 : i64} {
  func.func @_mlp_kernel(%arg0: i32, %arg1: memref<1024x16xf32, #tpu.memory_space<vmem>>, %arg2: memref<32x16xf32, #tpu.memory_space<vmem>>, %arg3: memref<32x32xf32, #tpu.memory_space<vmem>>, %arg4: memref<32x32xf32, #tpu.memory_space<vmem>>, %arg5: memref<32x32xf32, #tpu.memory_space<vmem>>, %arg6: memref<8x32xf32, #tpu.memory_space<vmem>>, %arg7: memref<32x5xf32, #tpu.memory_space<vmem>>, %arg8: memref<8x1024xf32, #tpu.memory_space<vmem>>) attributes {dimension_semantics = [#tpu.dimension_semantics<parallel>], iteration_bounds = array<i64: 2>, scalar_prefetch = 0 : i64, scratch_operands = 0 : i64, tpu.core_type = #tpu.core_type<tc>, window_params = [{transform_indices = @transform_0, window_bounds = array<i64: 1024, 16>}, {pipeline_mode = #tpu.pipeline_mode<synchronous>, transform_indices = @transform_1, window_bounds = array<i64: 32, 16>}, {pipeline_mode = #tpu.pipeline_mode<synchronous>, transform_indices = @transform_2, window_bounds = array<i64: 32, 32>}, {pipeline_mode = #tpu.pipeline_mode<synchronous>, transform_indices = @transform_3, window_bounds = array<i64: 32, 32>}, {pipeline_mode = #tpu.pipeline_mode<synchronous>, transform_indices = @transform_4, window_bounds = array<i64: 32, 32>}, {pipeline_mode = #tpu.pipeline_mode<synchronous>, transform_indices = @transform_5, window_bounds = array<i64: 8, 32>}, {pipeline_mode = #tpu.pipeline_mode<synchronous>, transform_indices = @transform_6, window_bounds = array<i64: 32, 5>}, {transform_indices = @transform_7, window_bounds = array<i64: 8, 1024>}]} {
    %c0 = arith.constant 0 : index
    %c0_0 = arith.constant 0 : index
    %0 = vector.load %arg2[%c0, %c0_0] : memref<32x16xf32, #tpu.memory_space<vmem>>, vector<32x16xf32>
    %c0_1 = arith.constant 0 : index
    %c0_2 = arith.constant 0 : index
    %1 = vector.load %arg3[%c0_1, %c0_2] : memref<32x32xf32, #tpu.memory_space<vmem>>, vector<32x32xf32>
    %c0_3 = arith.constant 0 : index
    %c0_4 = arith.constant 0 : index
    %2 = vector.load %arg4[%c0_3, %c0_4] : memref<32x32xf32, #tpu.memory_space<vmem>>, vector<32x32xf32>
    %c0_5 = arith.constant 0 : index
    %c0_6 = arith.constant 0 : index
    %3 = vector.load %arg5[%c0_5, %c0_6] : memref<32x32xf32, #tpu.memory_space<vmem>>, vector<32x32xf32>
    %c0_7 = arith.constant 0 : index
    %c0_8 = arith.constant 0 : index
    %4 = vector.load %arg6[%c0_7, %c0_8] : memref<8x32xf32, #tpu.memory_space<vmem>>, vector<8x32xf32>
    %c0_9 = arith.constant 0 : index
    %c0_10 = arith.constant 0 : index
    %5 = vector.load %arg7[%c0_9, %c0_10] : memref<32x5xf32, #tpu.memory_space<vmem>>, vector<32x1xf32>
    %c0_11 = arith.constant 0 : index
    %c1 = arith.constant 1 : index
    %6 = vector.load %arg7[%c0_11, %c1] : memref<32x5xf32, #tpu.memory_space<vmem>>, vector<32x1xf32>
    %c0_12 = arith.constant 0 : index
    %c2 = arith.constant 2 : index
    %7 = vector.load %arg7[%c0_12, %c2] : memref<32x5xf32, #tpu.memory_space<vmem>>, vector<32x1xf32>
    %c0_13 = arith.constant 0 : index
    %c3 = arith.constant 3 : index
    %8 = vector.load %arg7[%c0_13, %c3] : memref<32x5xf32, #tpu.memory_space<vmem>>, vector<32x1xf32>
    %c0_14 = arith.constant 0 : index
    %c4 = arith.constant 4 : index
    %9 = vector.load %arg7[%c0_14, %c4] : memref<32x5xf32, #tpu.memory_space<vmem>>, vector<8x1xf32>
    %c0_15 = arith.constant 0 : index
    %c0_16 = arith.constant 0 : index
    %10 = vector.load %arg1[%c0_15, %c0_16] : memref<1024x16xf32, #tpu.memory_space<vmem>>, vector<512x16xf32>
    %cst = arith.constant dense<0.000000e+00> : vector<32x512xf32>
    %11 = tpu.matmul %0, %10, %cst {dimension_numbers = #tpu.dot_dimension_numbers<[1], [1], [0], [0], [0, 0, 1, 0], [], []>} : vector<32x16xf32>, vector<512x16xf32>, vector<32x512xf32> -> vector<32x512xf32>
    %12 = vector.broadcast %5 : vector<32x1xf32> to vector<32x512xf32>
    %13 = arith.addf %11, %12 : vector<32x512xf32>
    %cst_17 = arith.constant 0.000000e+00 : f32
    %14 = vector.broadcast %cst_17 : f32 to vector<32x512xf32>
    %15 = arith.maximumf %13, %14 : vector<32x512xf32>
    %cst_18 = arith.constant dense<0.000000e+00> : vector<32x512xf32>
    %16 = tpu.matmul %1, %15, %cst_18 {dimension_numbers = #tpu.dot_dimension_numbers<[1], [0], [0], [1], [0, 0, 1, 1], [], []>} : vector<32x32xf32>, vector<32x512xf32>, vector<32x512xf32> -> vector<32x512xf32>
    %17 = vector.broadcast %6 : vector<32x1xf32> to vector<32x512xf32>
    %18 = arith.addf %16, %17 : vector<32x512xf32>
    %cst_19 = arith.constant 0.000000e+00 : f32
    %19 = vector.broadcast %cst_19 : f32 to vector<32x512xf32>
    %20 = arith.maximumf %18, %19 : vector<32x512xf32>
    %cst_20 = arith.constant dense<0.000000e+00> : vector<32x512xf32>
    %21 = tpu.matmul %2, %20, %cst_20 {dimension_numbers = #tpu.dot_dimension_numbers<[1], [0], [0], [1], [0, 0, 1, 1], [], []>} : vector<32x32xf32>, vector<32x512xf32>, vector<32x512xf32> -> vector<32x512xf32>
    %22 = vector.broadcast %7 : vector<32x1xf32> to vector<32x512xf32>
    %23 = arith.addf %21, %22 : vector<32x512xf32>
    %cst_21 = arith.constant 0.000000e+00 : f32
    %24 = vector.broadcast %cst_21 : f32 to vector<32x512xf32>
    %25 = arith.maximumf %23, %24 : vector<32x512xf32>
    %cst_22 = arith.constant dense<0.000000e+00> : vector<32x512xf32>
    %26 = tpu.matmul %3, %25, %cst_22 {dimension_numbers = #tpu.dot_dimension_numbers<[1], [0], [0], [1], [0, 0, 1, 1], [], []>} : vector<32x32xf32>, vector<32x512xf32>, vector<32x512xf32> -> vector<32x512xf32>
    %27 = vector.broadcast %8 : vector<32x1xf32> to vector<32x512xf32>
    %28 = arith.addf %26, %27 : vector<32x512xf32>
    %cst_23 = arith.constant 0.000000e+00 : f32
    %29 = vector.broadcast %cst_23 : f32 to vector<32x512xf32>
    %30 = arith.maximumf %28, %29 : vector<32x512xf32>
    %cst_24 = arith.constant dense<0.000000e+00> : vector<8x512xf32>
    %31 = tpu.matmul %4, %30, %cst_24 {dimension_numbers = #tpu.dot_dimension_numbers<[1], [0], [0], [1], [0, 0, 1, 1], [], []>} : vector<8x32xf32>, vector<32x512xf32>, vector<8x512xf32> -> vector<8x512xf32>
    %32 = vector.broadcast %9 : vector<8x1xf32> to vector<8x512xf32>
    %33 = arith.addf %31, %32 : vector<8x512xf32>
    %c0_25 = arith.constant 0 : index
    %c0_26 = arith.constant 0 : index
    %34 = vector.load %arg8[%c0_25, %c0_26] : memref<8x1024xf32, #tpu.memory_space<vmem>>, vector<8x512xf32>
    tpu.vector_store %arg8[%c0_25, %c0_26], %33 {strides = array<i32>} : memref<8x1024xf32, #tpu.memory_space<vmem>>, vector<8x512xf32>,
    %c512 = arith.constant 512 : index
    %c0_27 = arith.constant 0 : index
    %35 = vector.load %arg1[%c512, %c0_27] : memref<1024x16xf32, #tpu.memory_space<vmem>>, vector<512x16xf32>
    %cst_28 = arith.constant dense<0.000000e+00> : vector<32x512xf32>
    %36 = tpu.matmul %0, %35, %cst_28 {dimension_numbers = #tpu.dot_dimension_numbers<[1], [1], [0], [0], [0, 0, 1, 0], [], []>} : vector<32x16xf32>, vector<512x16xf32>, vector<32x512xf32> -> vector<32x512xf32>
    %37 = vector.broadcast %5 : vector<32x1xf32> to vector<32x512xf32>
    %38 = arith.addf %36, %37 : vector<32x512xf32>
    %cst_29 = arith.constant 0.000000e+00 : f32
    %39 = vector.broadcast %cst_29 : f32 to vector<32x512xf32>
    %40 = arith.maximumf %38, %39 : vector<32x512xf32>
    %cst_30 = arith.constant dense<0.000000e+00> : vector<32x512xf32>
    %41 = tpu.matmul %1, %40, %cst_30 {dimension_numbers = #tpu.dot_dimension_numbers<[1], [0], [0], [1], [0, 0, 1, 1], [], []>} : vector<32x32xf32>, vector<32x512xf32>, vector<32x512xf32> -> vector<32x512xf32>
    %42 = vector.broadcast %6 : vector<32x1xf32> to vector<32x512xf32>
    %43 = arith.addf %41, %42 : vector<32x512xf32>
    %cst_31 = arith.constant 0.000000e+00 : f32
    %44 = vector.broadcast %cst_31 : f32 to vector<32x512xf32>
    %45 = arith.maximumf %43, %44 : vector<32x512xf32>
    %cst_32 = arith.constant dense<0.000000e+00> : vector<32x512xf32>
    %46 = tpu.matmul %2, %45, %cst_32 {dimension_numbers = #tpu.dot_dimension_numbers<[1], [0], [0], [1], [0, 0, 1, 1], [], []>} : vector<32x32xf32>, vector<32x512xf32>, vector<32x512xf32> -> vector<32x512xf32>
    %47 = vector.broadcast %7 : vector<32x1xf32> to vector<32x512xf32>
    %48 = arith.addf %46, %47 : vector<32x512xf32>
    %cst_33 = arith.constant 0.000000e+00 : f32
    %49 = vector.broadcast %cst_33 : f32 to vector<32x512xf32>
    %50 = arith.maximumf %48, %49 : vector<32x512xf32>
    %cst_34 = arith.constant dense<0.000000e+00> : vector<32x512xf32>
    %51 = tpu.matmul %3, %50, %cst_34 {dimension_numbers = #tpu.dot_dimension_numbers<[1], [0], [0], [1], [0, 0, 1, 1], [], []>} : vector<32x32xf32>, vector<32x512xf32>, vector<32x512xf32> -> vector<32x512xf32>
    %52 = vector.broadcast %8 : vector<32x1xf32> to vector<32x512xf32>
    %53 = arith.addf %51, %52 : vector<32x512xf32>
    %cst_35 = arith.constant 0.000000e+00 : f32
    %54 = vector.broadcast %cst_35 : f32 to vector<32x512xf32>
    %55 = arith.maximumf %53, %54 : vector<32x512xf32>
    %cst_36 = arith.constant dense<0.000000e+00> : vector<8x512xf32>
    %56 = tpu.matmul %4, %55, %cst_36 {dimension_numbers = #tpu.dot_dimension_numbers<[1], [0], [0], [1], [0, 0, 1, 1], [], []>} : vector<8x32xf32>, vector<32x512xf32>, vector<8x512xf32> -> vector<8x512xf32>
    %57 = vector.broadcast %9 : vector<8x1xf32> to vector<8x512xf32>
    %58 = arith.addf %56, %57 : vector<8x512xf32>
    %c0_37 = arith.constant 0 : index
    %c512_38 = arith.constant 512 : index
    %59 = vector.load %arg8[%c0_37, %c512_38] : memref<8x1024xf32, #tpu.memory_space<vmem>>, vector<8x512xf32>
    tpu.vector_store %arg8[%c0_37, %c512_38], %58 {strides = array<i32>} : memref<8x1024xf32, #tpu.memory_space<vmem>>, vector<8x512xf32>,
    return
  }
  func.func @transform_0(%arg0: i32) -> (i32, i32) {
    %c0_i32 = arith.constant 0 : i32
    %c0_i32_0 = arith.constant 0 : i32
    return %arg0, %c0_i32 : i32, i32
  }
  func.func @transform_1(%arg0: i32) -> (i32, i32) {
    %c0_i32 = arith.constant 0 : i32
    %c0_i32_0 = arith.constant 0 : i32
    %c0_i32_1 = arith.constant 0 : i32
    return %c0_i32, %c0_i32_0 : i32, i32
  }
  func.func @transform_2(%arg0: i32) -> (i32, i32) {
    %c0_i32 = arith.constant 0 : i32
    %c0_i32_0 = arith.constant 0 : i32
    %c0_i32_1 = arith.constant 0 : i32
    return %c0_i32, %c0_i32_0 : i32, i32
  }
  func.func @transform_3(%arg0: i32) -> (i32, i32) {
    %c0_i32 = arith.constant 0 : i32
    %c0_i32_0 = arith.constant 0 : i32
    %c0_i32_1 = arith.constant 0 : i32
    return %c0_i32, %c0_i32_0 : i32, i32
  }
  func.func @transform_4(%arg0: i32) -> (i32, i32) {
    %c0_i32 = arith.constant 0 : i32
    %c0_i32_0 = arith.constant 0 : i32
    %c0_i32_1 = arith.constant 0 : i32
    return %c0_i32, %c0_i32_0 : i32, i32
  }
  func.func @transform_5(%arg0: i32) -> (i32, i32) {
    %c0_i32 = arith.constant 0 : i32
    %c0_i32_0 = arith.constant 0 : i32
    %c0_i32_1 = arith.constant 0 : i32
    return %c0_i32, %c0_i32_0 : i32, i32
  }
  func.func @transform_6(%arg0: i32) -> (i32, i32) {
    %c0_i32 = arith.constant 0 : i32
    %c0_i32_0 = arith.constant 0 : i32
    %c0_i32_1 = arith.constant 0 : i32
    return %c0_i32, %c0_i32_0 : i32, i32
  }
  func.func @transform_7(%arg0: i32) -> (i32, i32) {
    %c0_i32 = arith.constant 0 : i32
    %c0_i32_0 = arith.constant 0 : i32
    return %c0_i32, %arg0 : i32, i32
  }
}

</mosaic_0001>

<llo_original>
// kernel: tpu_custom_call.1
$region0: #{tpu_custom_call.1}
  #allocation0 [shape = 'u32[]', space=smem, size = 0x4, offset = 0x4, fixed_abs, tag = 'smem constant byte address 0x4 - core index']
  #allocation1 [shape = 'u32[144,128]{1,0:T(1,128)}', space=vmem, size = 0x12000, scoped, tag = 'internal scratch']
  %s0 = inlined_call_operand.vmem [shape: f32[1280,16], index: 0, kind: input, shape index: {}]
  %s1 = inlined_call_operand.vmem [shape: f32[32,16], index: 1, kind: input, shape index: {}]
  %s2 = inlined_call_operand.vmem [shape: f32[32,32], index: 2, kind: input, shape index: {}]
  %s3 = inlined_call_operand.vmem [shape: f32[32,32], index: 3, kind: input, shape index: {}]
  %s4 = inlined_call_operand.vmem [shape: f32[32,32], index: 4, kind: input, shape index: {}]
  %s5 = inlined_call_operand.vmem [shape: f32[8,32], index: 5, kind: input, shape index: {}]
  %s6 = inlined_call_operand.vmem [shape: f32[32,5], index: 6, kind: input, shape index: {}]
  %s7 = inlined_call_operand.hbm [shape: f32[8,1280], index: 7, kind: output, shape index: {}]
  %s8 = sld [smem:[#allocation0]]
  $region61: #{tpu_custom_call.1} parent=0
    _
  %s10 = ssub.s32 1, %s8
  %s11 = scalar_select 0, %s10, %s8
  $region1: #{tpu_custom_call.1} parent=0
    #allocation2 [shape = 'u8[65536]{0}', space=vmem, size = 0x10000, scoped, tag = 'output window, operand 0']
    #allocation3 [shape = 's32[2]{0}', space=sflag, size = 0x8, scoped, tag = 'scoped memory for tpu_custom_call.1']
    %12 = vsyncpa [#allocation3], 0
    %s13 = scalar_lea.sflag [#allocation3], 1
    %14 = vsyncpa %s13, 0
    loop: start=0, step=1, limit=4
    $region2: #{tpu_custom_call.1} parent=1 // loop_pre_header
      _
    $region3: #{tpu_custom_call.1} parent=1 // loop_header
      %s16 = sphi 0, %s20
      %p17 = scmp.ge.s32.totalorder %s16, 4
      %s26 = sphi 0, %s28
      %s29 = sphi 0, %s26
      %s30 = sphi 0, %s29
      %s46 = sphi 0, %s30
      %s50 = sphi 0, %s50
      %s52 = sphi 0, %s50
      %s53 = sphi 0, %s52
      %s67 = sphi 0, %s53
      %s71 = sphi 0, %s71
      %s73 = sphi 0, %s71
      %s74 = sphi 0, %s73
      %s88 = sphi 0, %s74
      %s92 = sphi 0, %s92
      %s94 = sphi 0, %s92
      %s95 = sphi 0, %s94
      %s109 = sphi 0, %s95
      %s113 = sphi 0, %s113
      %s115 = sphi 0, %s113
      %s116 = sphi 0, %s115
      %s130 = sphi 0, %s116
      %s134 = sphi 0, %s134
      %s136 = sphi 0, %s134
      %s137 = sphi 0, %s136
      %s151 = sphi 0, %s137
      %s155 = sphi 0, %s155
      %s157 = sphi 0, %s155
      %s158 = sphi 0, %s157
      %s172 = sphi 0, %s158
      %s178 = sphi 0, %s180
      %s181 = sphi 0, %s178
      %s182 = sphi 0, %s181
      %s198 = sphi 0, %s182
    $region4: #{tpu_custom_call.1} parent=1 // loop_header_branch
      %19 = sbr.rel (%p17) target = $region8
    $region5: #{tpu_custom_call.1} parent=1 // loop_body
      %s21 = ssub.s32 %s16, 1
      %s22 = ssub.s32 %s16, 2
      %s23 = sadd.s32 %s16, 1
      %s24 = ssub.s32 %s16, %s23
      %p25 = scmp.eq.s32.totalorder %s24, 0
      %s27 = sadd.s32 %s26, 1
      %s28 = scalar_select %p25, %s26, %s27
      %p31 = pneg %p25
      %p32 = scmp.eq.s32.totalorder %s16, 1
      %p33 = por %p31, %p32
      %p34 = scmp.ne.s32.totalorder %s26, %s29
      %p35 = scmp.eq.s32.totalorder %s16, 0
      %p36 = por %p34, %p35
      %p37 = scmp.ne.s32.totalorder %s26, %s29
      %p38 = scmp.eq.s32.totalorder %s21, 1
      %p39 = por %p37, %p38
      %p40 = scmp.ne.s32.totalorder %s29, %s30
      %p41 = scmp.eq.s32.totalorder %s21, 0
      %p42 = por %p40, %p41
      %p43 = scmp.ne.s32.totalorder %s29, %s30
      %p44 = scmp.eq.s32.totalorder %s22, 1
      %p45 = por %p43, %p44
      %p47 = scmp.ne.s32.totalorder %s30, %s46
      %p48 = scmp.eq.s32.totalorder %s22, 0
      %p49 = por %p47, %p48
      %s51 = sadd.s32 %s50, 1
      %p54 = scmp.eq.s32.totalorder %s16, 1
      %p55 = scmp.ne.s32.totalorder %s50, %s52
      %p56 = scmp.eq.s32.totalorder %s16, 0
      %p57 = por %p55, %p56
      %p58 = scmp.ne.s32.totalorder %s50, %s52
      %p59 = scmp.eq.s32.totalorder %s21, 1
      %p60 = por %p58, %p59
      %p61 = scmp.ne.s32.totalorder %s52, %s53
      %p62 = scmp.eq.s32.totalorder %s21, 0
      %p63 = por %p61, %p62
      %p64 = scmp.ne.s32.totalorder %s52, %s53
      %p65 = scmp.eq.s32.totalorder %s22, 1
      %p66 = por %p64, %p65
      %p68 = scmp.ne.s32.totalorder %s53, %s67
      %p69 = scmp.eq.s32.totalorder %s22, 0
      %p70 = por %p68, %p69
      %s72 = sadd.s32 %s71, 1
      %p75 = scmp.eq.s32.totalorder %s16, 1
      %p76 = scmp.ne.s32.totalorder %s71, %s73
      %p77 = scmp.eq.s32.totalorder %s16, 0
      %p78 = por %p76, %p77
      %p79 = scmp.ne.s32.totalorder %s71, %s73
      %p80 = scmp.eq.s32.totalorder %s21, 1
      %p81 = por %p79, %p80
      %p82 = scmp.ne.s32.totalorder %s73, %s74
      %p83 = scmp.eq.s32.totalorder %s21, 0
      %p84 = por %p82, %p83
      %p85 = scmp.ne.s32.totalorder %s73, %s74
      %p86 = scmp.eq.s32.totalorder %s22, 1
      %p87 = por %p85, %p86
      %p89 = scmp.ne.s32.totalorder %s74, %s88
      %p90 = scmp.eq.s32.totalorder %s22, 0
      %p91 = por %p89, %p90
      %s93 = sadd.s32 %s92, 1
      %p96 = scmp.eq.s32.totalorder %s16, 1
      %p97 = scmp.ne.s32.totalorder %s92, %s94
      %p98 = scmp.eq.s32.totalorder %s16, 0
      %p99 = por %p97, %p98
      %p100 = scmp.ne.s32.totalorder %s92, %s94
      %p101 = scmp.eq.s32.totalorder %s21, 1
      %p102 = por %p100, %p101
      %p103 = scmp.ne.s32.totalorder %s94, %s95
      %p104 = scmp.eq.s32.totalorder %s21, 0
      %p105 = por %p103, %p104
      %p106 = scmp.ne.s32.totalorder %s94, %s95
      %p107 = scmp.eq.s32.totalorder %s22, 1
      %p108 = por %p106, %p107
      %p110 = scmp.ne.s32.totalorder %s95, %s109
      %p111 = scmp.eq.s32.totalorder %s22, 0
      %p112 = por %p110, %p111
      %s114 = sadd.s32 %s113, 1
      %p117 = scmp.eq.s32.totalorder %s16, 1
      %p118 = scmp.ne.s32.totalorder %s113, %s115
      %p119 = scmp.eq.s32.totalorder %s16, 0
      %p120 = por %p118, %p119
      %p121 = scmp.ne.s32.totalorder %s113, %s115
      %p122 = scmp.eq.s32.totalorder %s21, 1
      %p123 = por %p121, %p122
      %p124 = scmp.ne.s32.totalorder %s115, %s116
      %p125 = scmp.eq.s32.totalorder %s21, 0
      %p126 = por %p124, %p125
      %p127 = scmp.ne.s32.totalorder %s115, %s116
      %p128 = scmp.eq.s32.totalorder %s22, 1
      %p129 = por %p127, %p128
      %p131 = scmp.ne.s32.totalorder %s116, %s130
      %p132 = scmp.eq.s32.totalorder %s22, 0
      %p133 = por %p131, %p132
      %s135 = sadd.s32 %s134, 1
      %p138 = scmp.eq.s32.totalorder %s16, 1
      %p139 = scmp.ne.s32.totalorder %s134, %s136
      %p140 = scmp.eq.s32.totalorder %s16, 0
      %p141 = por %p139, %p140
      %p142 = scmp.ne.s32.totalorder %s134, %s136
      %p143 = scmp.eq.s32.totalorder %s21, 1
      %p144 = por %p142, %p143
      %p145 = scmp.ne.s32.totalorder %s136, %s137
      %p146 = scmp.eq.s32.totalorder %s21, 0
      %p147 = por %p145, %p146
      %p148 = scmp.ne.s32.totalorder %s136, %s137
      %p149 = scmp.eq.s32.totalorder %s22, 1
      %p150 = por %p148, %p149
      %p152 = scmp.ne.s32.totalorder %s137, %s151
      %p153 = scmp.eq.s32.totalorder %s22, 0
      %p154 = por %p152, %p153
      %s156 = sadd.s32 %s155, 1
      %p159 = scmp.eq.s32.totalorder %s16, 1
      %p160 = scmp.ne.s32.totalorder %s155, %s157
      %p161 = scmp.eq.s32.totalorder %s16, 0
      %p162 = por %p160, %p161
      %p163 = scmp.ne.s32.totalorder %s155, %s157
      %p164 = scmp.eq.s32.totalorder %s21, 1
      %p165 = por %p163, %p164
      %p166 = scmp.ne.s32.totalorder %s157, %s158
      %p167 = scmp.eq.s32.totalorder %s21, 0
      %p168 = por %p166, %p167
      %p169 = scmp.ne.s32.totalorder %s157, %s158
      %p170 = scmp.eq.s32.totalorder %s22, 1
      %p171 = por %p169, %p170
      %p173 = scmp.ne.s32.totalorder %s158, %s172
      %p174 = scmp.eq.s32.totalorder %s22, 0
      %p175 = por %p173, %p174
      %s176 = ssub.s32 %s16, %s23
      %p177 = scmp.eq.s32.totalorder %s176, 0
      %s179 = sadd.s32 %s178, 1
      %s180 = scalar_select %p177, %s178, %s179
      %p183 = pneg %p177
      %p184 = scmp.eq.s32.totalorder %s16, 1
      %p185 = por %p183, %p184
      %p186 = scmp.ne.s32.totalorder %s178, %s181
      %p187 = scmp.eq.s32.totalorder %s16, 0
      %p188 = por %p186, %p187
      %p189 = scmp.ne.s32.totalorder %s178, %s181
      %p190 = scmp.eq.s32.totalorder %s21, 1
      %p191 = por %p189, %p190
      %p192 = scmp.ne.s32.totalorder %s181, %s182
      %p193 = scmp.eq.s32.totalorder %s21, 0
      %p194 = por %p192, %p193
      %p195 = scmp.ne.s32.totalorder %s181, %s182
      %p196 = scmp.eq.s32.totalorder %s22, 1
      %p197 = por %p195, %p196
      %p199 = scmp.ne.s32.totalorder %s182, %s198
      %p200 = scmp.eq.s32.totalorder %s22, 0
      %p201 = por %p199, %p200
      %p202 = scmp.le.s32.totalorder 1, %s16
      %p203 = scmp.lt.s32.totalorder %s16, 3
      %p204 = pnand %p202, %p203
      %p205 = pneg %p204
      // Predicated region
      $region9: #{tpu_custom_call.1} parent=5 // pred_check
        _
      $region10: #{tpu_custom_call.1} parent=5 // pred_check_branch
        %207 = sbr.rel (%p204) target = $region12
      $region11: #{tpu_custom_call.1} parent=5 // pred_region
        %s208 = ssub.s32 %s16, 1
        // Predicated region
        $region13: #{tpu_custom_call.1} parent=11 // pred_check
          %p209 = pneg %p63
        $region14: #{tpu_custom_call.1} parent=11 // pred_check_branch
          %211 = sbr.rel (%p209) target = $region16
        $region15: #{tpu_custom_call.1} parent=11 // pred_region
          _
        $region16: #{tpu_custom_call.1} parent=11 // pred_fallthru
          _
        // Predicated region
        $region17: #{tpu_custom_call.1} parent=11 // pred_check
          %p212 = pneg %p84
        $region18: #{tpu_custom_call.1} parent=11 // pred_check_branch
          %214 = sbr.rel (%p212) target = $region20
        $region19: #{tpu_custom_call.1} parent=11 // pred_region
          _
        $region20: #{tpu_custom_call.1} parent=11 // pred_fallthru
          _
        // Predicated region
        $region21: #{tpu_custom_call.1} parent=11 // pred_check
          %p215 = pneg %p105
        $region22: #{tpu_custom_call.1} parent=11 // pred_check_branch
          %217 = sbr.rel (%p215) target = $region24
        $region23: #{tpu_custom_call.1} parent=11 // pred_region
          _
        $region24: #{tpu_custom_call.1} parent=11 // pred_fallthru
          _
        // Predicated region
        $region25: #{tpu_custom_call.1} parent=11 // pred_check
          %p218 = pneg %p126
        $region26: #{tpu_custom_call.1} parent=11 // pred_check_branch
          %220 = sbr.rel (%p218) target = $region28
        $region27: #{tpu_custom_call.1} parent=11 // pred_region
          _
        $region28: #{tpu_custom_call.1} parent=11 // pred_fallthru
          _
        // Predicated region
        $region29: #{tpu_custom_call.1} parent=11 // pred_check
          %p221 = pneg %p147
        $region30: #{tpu_custom_call.1} parent=11 // pred_check_branch
          %223 = sbr.rel (%p221) target = $region32
        $region31: #{tpu_custom_call.1} parent=11 // pred_region
          _
        $region32: #{tpu_custom_call.1} parent=11 // pred_fallthru
          _
        // Predicated region
        $region33: #{tpu_custom_call.1} parent=11 // pred_check
          %p224 = pneg %p168
        $region34: #{tpu_custom_call.1} parent=11 // pred_check_branch
          %226 = sbr.rel (%p224) target = $region36
        $region35: #{tpu_custom_call.1} parent=11 // pred_region
          _
        $region36: #{tpu_custom_call.1} parent=11 // pred_fallthru
          _
      $region12: #{tpu_custom_call.1} parent=5 // pred_fallthru
        _
      %p227 = scmp.lt.s32.totalorder %s16, 2
      // Predicated region
      $region37: #{tpu_custom_call.1} parent=5 // pred_check
        %p228 = pneg %p227
      $region38: #{tpu_custom_call.1} parent=5 // pred_check_branch
        %230 = sbr.rel (%p228) target = $region40
      $region39: #{tpu_custom_call.1} parent=5 // pred_region
        // Predicated region
        $region41: #{tpu_custom_call.1} parent=39 // pred_check
          %p231 = pneg %p36
        $region42: #{tpu_custom_call.1} parent=39 // pred_check_branch
          %233 = sbr.rel (%p231) target = $region44
        $region43: #{tpu_custom_call.1} parent=39 // pred_region
          %s234 = smul.u32 128, %s16
          %s235 = ssub.s32 160, %s234
          %p236 = scmp.lt.s32.totalorder %s235, 128
          %s237 = scalar_select %p236, %s235, 128
          %s238 = smul.u32 128, %s237
          %p239 = scmp.lt.s32.totalorder %s234, 159
          %s240 = scalar_select %p239, %s234, 159
          %s241 = smul.addr %s240, 8
          %s242 = scalar_lea.vmem %s0, %s241
          %s243 = smul.u32 128, %s16
          %s244 = ssub.s32 160, %s243
          %p245 = scmp.lt.s32.totalorder %s244, 128
          %s246 = scalar_select %p245, %s244, 128
          %s247 = smul.u32 128, %s246
        $region44: #{tpu_custom_call.1} parent=39 // pred_fallthru
          _
      $region40: #{tpu_custom_call.1} parent=5 // pred_fallthru
        _
      %p248 = scmp.le.s32.totalorder 1, %s16
      %p249 = scmp.lt.s32.totalorder %s16, 3
      %p250 = pnand %p248, %p249
      %p251 = pneg %p250
      // Predicated region
      $region45: #{tpu_custom_call.1} parent=5 // pred_check
        _
      $region46: #{tpu_custom_call.1} parent=5 // pred_check_branch
        %253 = sbr.rel (%p250) target = $region48
      $region47: #{tpu_custom_call.1} parent=5 // pred_region
        %s254 = ssub.s32 %s16, 1
        %s255 = smul.u32 128, %s21
        %s256 = ssub.s32 160, %s255
        %p257 = scmp.lt.s32.totalorder %s256, 128
        %s258 = scalar_select %p257, %s256, 128
        %s259 = smul.u32 128, %s258
        %p260 = scmp.lt.s32.totalorder %s255, 159
        %s261 = scalar_select %p260, %s255, 159
        %s262 = smul.addr %s261, 8
        %s263 = scalar_lea.vmem %s0, %s262
        %p264 = pneg %p42
        %p265 = pneg %p39
        %p266 = pneg %p63
        %p267 = pneg %p60
        %p268 = pneg %p84
        %p269 = pneg %p81
        %p270 = pneg %p105
        %p271 = pneg %p102
        %p272 = pneg %p126
        %p273 = pneg %p123
        %p274 = pneg %p147
        %p275 = pneg %p144
        %p276 = pneg %p168
        %p277 = pneg %p165
        %p278 = pneg %p194
        %p279 = pneg %p191
        %s280 = sand.u32 %s181, 1
        %s281 = scalar_lea.sflag [#allocation3], %s280
        %s282 = sand.u32 %s181, 1
        %s283 = smul.addr %s282, 64
        %s284 = scalar_lea.vmem [#allocation2], %s283
        %s285 = smul.u32 128, %s21
        %s286 = ssub.s32 160, %s285
        %p287 = scmp.lt.s32.totalorder %s286, 128
        %s288 = scalar_select %p287, %s286, 128
        %s289 = smul.u32 128, %s288
        %p290 = scmp.lt.s32.totalorder %s285, 159
        %s291 = scalar_select %p290, %s285, 159
        %s292 = smul.addr %s291, 8
        %s293 = scalar_lea.vmem %s0, %s292
        %s294 = smul.u32 128, %s21
        %s295 = ssub.s32 160, %s294
        %p296 = scmp.lt.s32.totalorder %s295, 128
        %s297 = scalar_select %p296, %s295, 128
        %s298 = smul.u32 128, %s297
        %s299 = smul.u32 8, %s21
        %s300 = ssub.s32 10, %s299
        %p301 = scmp.lt.s32.totalorder %s300, 8
        %s302 = scalar_select %p301, %s300, 8
        %s303 = smul.u32 128, %s302
        %v304 = vld [vmem:[%s1] sm:$0xff]
        %v305 = vld [vmem:[%s1 + $0x8] sm:$0xff]
        %v306 = vld [vmem:[%s1 + $0x10] sm:$0xff]
        %v307 = vld [vmem:[%s1 + $0x18] sm:$0xff]
        %v308 = vld [vmem:[%s2] sm:$0xff]
        %v309 = vld [vmem:[%s2 + $0x8] sm:$0xff]
        %v310 = vld [vmem:[%s2 + $0x10] sm:$0xff]
        %v311 = vld [vmem:[%s2 + $0x18] sm:$0xff]
        %v312 = vld [vmem:[%s3] sm:$0xff]
        %v313 = vld [vmem:[%s3 + $0x8] sm:$0xff]
        %v314 = vld [vmem:[%s3 + $0x10] sm:$0xff]
        %v315 = vld [vmem:[%s3 + $0x18] sm:$0xff]
        %v316 = vld [vmem:[%s4] sm:$0xff]
        %v317 = vld [vmem:[%s4 + $0x8] sm:$0xff]
        %v318 = vld [vmem:[%s4 + $0x10] sm:$0xff]
        %v319 = vld [vmem:[%s4 + $0x18] sm:$0xff]
        %v320 = vld [vmem:[%s5] sm:$0xff]
        %v321 = vld [vmem:[%s6] sm:$0xff]
        %v322 = vld [vmem:[%s6 + $0x8] sm:$0xff]
        %v323 = vld [vmem:[%s6 + $0x10] sm:$0xff]
        %v324 = vld [vmem:[%s6 + $0x18] sm:$0xff]
        %v325 = vld [vmem:[%s293] sm:$0xff]
        %v326 = vld [vmem:[%s293 + $0x8] sm:$0xff]
        %v327 = vld [vmem:[%s293 + $0x10] sm:$0xff]
        %v328 = vld [vmem:[%s293 + $0x18] sm:$0xff]
        %v329 = vld [vmem:[%s293 + $0x20] sm:$0xff]
        %v330 = vld [vmem:[%s293 + $0x28] sm:$0xff]
        %v331 = vld [vmem:[%s293 + $0x30] sm:$0xff]
        %v332 = vld [vmem:[%s293 + $0x38] sm:$0xff]
        %v333 = vld [vmem:[%s293 + $0x40] sm:$0xff]
        %v334 = vld [vmem:[%s293 + $0x48] sm:$0xff]
        %v335 = vld [vmem:[%s293 + $0x50] sm:$0xff]
        %v336 = vld [vmem:[%s293 + $0x58] sm:$0xff]
        %v337 = vld [vmem:[%s293 + $0x60] sm:$0xff]
        %v338 = vld [vmem:[%s293 + $0x68] sm:$0xff]
        %v339 = vld [vmem:[%s293 + $0x70] sm:$0xff]
        %v340 = vld [vmem:[%s293 + $0x78] sm:$0xff]
        %v341 = vld [vmem:[%s293 + $0x80] sm:$0xff]
        %v342 = vld [vmem:[%s293 + $0x88] sm:$0xff]
        %v343 = vld [vmem:[%s293 + $0x90] sm:$0xff]
        %v344 = vld [vmem:[%s293 + $0x98] sm:$0xff]
        %v345 = vld [vmem:[%s293 + $0xa0] sm:$0xff]
        %v346 = vld [vmem:[%s293 + $0xa8] sm:$0xff]
        %v347 = vld [vmem:[%s293 + $0xb0] sm:$0xff]
        %v348 = vld [vmem:[%s293 + $0xb8] sm:$0xff]
        %v349 = vld [vmem:[%s293 + $0xc0] sm:$0xff]
        %v350 = vld [vmem:[%s293 + $0xc8] sm:$0xff]
        %v351 = vld [vmem:[%s293 + $0xd0] sm:$0xff]
        %v352 = vld [vmem:[%s293 + $0xd8] sm:$0xff]
        %v353 = vld [vmem:[%s293 + $0xe0] sm:$0xff]
        %v354 = vld [vmem:[%s293 + $0xe8] sm:$0xff]
        %v355 = vld [vmem:[%s293 + $0xf0] sm:$0xff]
        %v356 = vld [vmem:[%s293 + $0xf8] sm:$0xff]
        %v357 = vld [vmem:[%s293 + $0x100] sm:$0xff]
        %v358 = vld [vmem:[%s293 + $0x108] sm:$0xff]
        %v359 = vld [vmem:[%s293 + $0x110] sm:$0xff]
        %v360 = vld [vmem:[%s293 + $0x118] sm:$0xff]
        %v361 = vld [vmem:[%s293 + $0x120] sm:$0xff]
        %v362 = vld [vmem:[%s293 + $0x128] sm:$0xff]
        %v363 = vld [vmem:[%s293 + $0x130] sm:$0xff]
        %v364 = vld [vmem:[%s293 + $0x138] sm:$0xff]
        %v365 = vld [vmem:[%s293 + $0x140] sm:$0xff]
        %v366 = vld [vmem:[%s293 + $0x148] sm:$0xff]
        %v367 = vld [vmem:[%s293 + $0x150] sm:$0xff]
        %v368 = vld [vmem:[%s293 + $0x158] sm:$0xff]
        %v369 = vld [vmem:[%s293 + $0x160] sm:$0xff]
        %v370 = vld [vmem:[%s293 + $0x168] sm:$0xff]
        %v371 = vld [vmem:[%s293 + $0x170] sm:$0xff]
        %v372 = vld [vmem:[%s293 + $0x178] sm:$0xff]
        %v373 = vld [vmem:[%s293 + $0x180] sm:$0xff]
        %v374 = vld [vmem:[%s293 + $0x188] sm:$0xff]
        %v375 = vld [vmem:[%s293 + $0x190] sm:$0xff]
        %v376 = vld [vmem:[%s293 + $0x198] sm:$0xff]
        %v377 = vld [vmem:[%s293 + $0x1a0] sm:$0xff]
        %v378 = vld [vmem:[%s293 + $0x1a8] sm:$0xff]
        %v379 = vld [vmem:[%s293 + $0x1b0] sm:$0xff]
        %v380 = vld [vmem:[%s293 + $0x1b8] sm:$0xff]
        %v381 = vld [vmem:[%s293 + $0x1c0] sm:$0xff]
        %v382 = vld [vmem:[%s293 + $0x1c8] sm:$0xff]
        %v383 = vld [vmem:[%s293 + $0x1d0] sm:$0xff]
        %v384 = vld [vmem:[%s293 + $0x1d8] sm:$0xff]
        %v385 = vld [vmem:[%s293 + $0x1e0] sm:$0xff]
        %v386 = vld [vmem:[%s293 + $0x1e8] sm:$0xff]
        %v387 = vld [vmem:[%s293 + $0x1f0] sm:$0xff]
        %v388 = vld [vmem:[%s293 + $0x1f8] sm:$0xff]
        %390 = vset.pattern.permute.xlu0 0
        %391 = vperm.xlu0 %390, %v321
        %v392 = vpop.permute.xlu0 %391
        %395 = vset.pattern.permute.xlu0 0
        %396 = vperm.xlu0 %395, %v322
        %v397 = vpop.permute.xlu0 %396
        %400 = vset.pattern.permute.xlu0 0
        %401 = vperm.xlu0 %400, %v323
        %v402 = vpop.permute.xlu0 %401
        %405 = vset.pattern.permute.xlu0 0
        %406 = vperm.xlu0 %405, %v324
        %v407 = vpop.permute.xlu0 %406
        %vm409 = vcmask 130048
        %v411 = vsel %vm409, %v304, 0
        %v414 = vsel %vm409, %v305, 0
        %v417 = vsel %vm409, %v306, 0
        %v420 = vsel %vm409, %v307, 0
        %v423 = vsel %vm409, %v325, 0
        %v426 = vsel %vm409, %v326, 0
        %v429 = vsel %vm409, %v327, 0
        %v432 = vsel %vm409, %v328, 0
        %v435 = vsel %vm409, %v329, 0
        %v438 = vsel %vm409, %v330, 0
        %v441 = vsel %vm409, %v331, 0
        %v444 = vsel %vm409, %v332, 0
        %v447 = vsel %vm409, %v333, 0
        %v450 = vsel %vm409, %v334, 0
        %v453 = vsel %vm409, %v335, 0
        %v456 = vsel %vm409, %v336, 0
        %v459 = vsel %vm409, %v337, 0
        %v462 = vsel %vm409, %v338, 0
        %v465 = vsel %vm409, %v339, 0
        %v468 = vsel %vm409, %v340, 0
        %v471 = vsel %vm409, %v341, 0
        %v474 = vsel %vm409, %v342, 0
        %v477 = vsel %vm409, %v343, 0
        %v480 = vsel %vm409, %v344, 0
        %v483 = vsel %vm409, %v345, 0
        %v486 = vsel %vm409, %v346, 0
        %v489 = vsel %vm409, %v347, 0
        %v492 = vsel %vm409, %v348, 0
        %v495 = vsel %vm409, %v349, 0
        %v498 = vsel %vm409, %v350, 0
        %v501 = vsel %vm409, %v351, 0
        %v504 = vsel %vm409, %v352, 0
        %v507 = vsel %vm409, %v353, 0
        %v510 = vsel %vm409, %v354, 0
        %v513 = vsel %vm409, %v355, 0
        %v516 = vsel %vm409, %v356, 0
        %v519 = vsel %vm409, %v357, 0
        %v522 = vsel %vm409, %v358, 0
        %v525 = vsel %vm409, %v359, 0
        %v528 = vsel %vm409, %v360, 0
        %v531 = vsel %vm409, %v361, 0
        %v534 = vsel %vm409, %v362, 0
        %v537 = vsel %vm409, %v363, 0
        %v540 = vsel %vm409, %v364, 0
        %v543 = vsel %vm409, %v365, 0
        %v546 = vsel %vm409, %v366, 0
        %v549 = vsel %vm409, %v367, 0
        %v552 = vsel %vm409, %v368, 0
        %v555 = vsel %vm409, %v369, 0
        %v558 = vsel %vm409, %v370, 0
        %v561 = vsel %vm409, %v371, 0
        %v564 = vsel %vm409, %v372, 0
        %v567 = vsel %vm409, %v373, 0
        %v570 = vsel %vm409, %v374, 0
        %v573 = vsel %vm409, %v375, 0
        %v576 = vsel %vm409, %v376, 0
        %v579 = vsel %vm409, %v377, 0
        %v582 = vsel %vm409, %v378, 0
        %v585 = vsel %vm409, %v379, 0
        %v588 = vsel %vm409, %v380, 0
        %v591 = vsel %vm409, %v381, 0
        %v594 = vsel %vm409, %v382, 0
        %v597 = vsel %vm409, %v383, 0
        %v600 = vsel %vm409, %v384, 0
        %v603 = vsel %vm409, %v385, 0
        %v606 = vsel %vm409, %v386, 0
        %v609 = vsel %vm409, %v387, 0
        %v612 = vsel %vm409, %v388, 0
        %614 = vmatprep.subr.mxu0 0.0
        %615 = vmatpush1.xpose.msra.mxu0 %v468
        %616 = vmatprep.subr.mxu0 0.0
        %617 = vmatpush1.xpose.msra.mxu0 %v465
        %618 = vmatprep.subr.mxu0 0.0
        %619 = vmatpush1.xpose.msra.mxu0 %v462
        %620 = vmatprep.subr.mxu0 0.0
        %621 = vmatpush1.xpose.msra.mxu0 %v459
        %622 = vmatprep.subr.mxu0 0.0
        %623 = vmatpush1.xpose.msra.mxu0 %v456
        %624 = vmatprep.subr.mxu0 0.0
        %625 = vmatpush1.xpose.msra.mxu0 %v453
        %626 = vmatprep.subr.mxu0 0.0
        %627 = vmatpush1.xpose.msra.mxu0 %v450
        %628 = vmatprep.subr.mxu0 0.0
        %629 = vmatpush1.xpose.msra.mxu0 %v447
        %630 = vmatprep.subr.mxu0 0.0
        %631 = vmatpush1.xpose.msra.mxu0 %v444
        %632 = vmatprep.subr.mxu0 0.0
        %633 = vmatpush1.xpose.msra.mxu0 %v441
        %634 = vmatprep.subr.mxu0 0.0
        %635 = vmatpush1.xpose.msra.mxu0 %v438
        %636 = vmatprep.subr.mxu0 0.0
        %637 = vmatpush1.xpose.msra.mxu0 %v435
        %638 = vmatprep.subr.mxu0 0.0
        %639 = vmatpush1.xpose.msra.mxu0 %v432
        %640 = vmatprep.subr.mxu0 0.0
        %641 = vmatpush1.xpose.msra.mxu0 %v429
        %642 = vmatprep.subr.mxu0 0.0
        %643 = vmatpush1.xpose.msra.mxu0 %v426
        %644 = vmatprep.subr.mxu0 0.0
        %645 = vmatpush1.xpose.msra.mxu0 %v423
        %646 = vmatprep.subr.mxu0 0.0
        %647 = vmatpush2.xpose.msra.mxu0 %v516
        %648 = vmatprep.subr.mxu0 0.0
        %649 = vmatpush2.xpose.msra.mxu0 %v513
        %650 = vmatprep.subr.mxu0 0.0
        %651 = vmatpush2.xpose.msra.mxu0 %v510
        %652 = vmatprep.subr.mxu0 0.0
        %653 = vmatpush2.xpose.msra.mxu0 %v507
        %654 = vmatprep.subr.mxu0 0.0
        %655 = vmatpush2.xpose.msra.mxu0 %v504
        %656 = vmatprep.subr.mxu0 0.0
        %657 = vmatpush2.xpose.msra.mxu0 %v501
        %658 = vmatprep.subr.mxu0 0.0
        %659 = vmatpush2.xpose.msra.mxu0 %v498
        %660 = vmatprep.subr.mxu0 0.0
        %661 = vmatpush2.xpose.msra.mxu0 %v495
        %662 = vmatprep.subr.mxu0 0.0
        %663 = vmatpush2.xpose.msra.mxu0 %v492
        %664 = vmatprep.subr.mxu0 0.0
        %665 = vmatpush2.xpose.msra.mxu0 %v489
        %666 = vmatprep.subr.mxu0 0.0
        %667 = vmatpush2.xpose.msra.mxu0 %v486
        %668 = vmatprep.subr.mxu0 0.0
        %669 = vmatpush2.xpose.msra.mxu0 %v483
        %670 = vmatprep.subr.mxu0 0.0
        %671 = vmatpush2.xpose.msra.mxu0 %v480
        %672 = vmatprep.subr.mxu0 0.0
        %673 = vmatpush2.xpose.msra.mxu0 %v477
        %674 = vmatprep.subr.mxu0 0.0
        %675 = vmatpush2.xpose.msra.mxu0 %v474
        %676 = vmatprep.subr.mxu0 0.0
        %677 = vmatpush2.xpose.msra.mxu0 %v471
        %678 = vmatprep.mubr.f32.mxu0 0.0
        %679 = vmatmul.mubr.f32.gmra.mxu0 %v411
        %v680 = vpop.f32.mrf.mxu0
        %v681 = vadd.f32 %v392, %v680
        %v682 = vpop.f32.mrf.mxu0
        %v683 = vadd.f32 %v392, %v682
        %684 = vmatprep.mubr.f32.mxu0 0.0
        %685 = vmatmul.mubr.f32.gmra.mxu0 %v414
        %v686 = vpop.f32.mrf.mxu0
        %v687 = vadd.f32 %v397, %v686
        %v688 = vpop.f32.mrf.mxu0
        %v689 = vadd.f32 %v397, %v688
        %690 = vmatprep.mubr.f32.mxu0 0.0
        %691 = vmatmul.mubr.f32.gmra.mxu0 %v417
        %v692 = vpop.f32.mrf.mxu0
        %v693 = vadd.f32 %v402, %v692
        %v694 = vpop.f32.mrf.mxu0
        %v695 = vadd.f32 %v402, %v694
        %696 = vmatprep.mubr.f32.mxu0 0.0
        %697 = vmatmul.mubr.f32.gmra.mxu0 %v420
        %v698 = vpop.f32.mrf.mxu0
        %v699 = vadd.f32 %v407, %v698
        %v700 = vpop.f32.mrf.mxu0
        %v701 = vadd.f32 %v407, %v700
        %702 = vdwg.mxu0
        %703 = vmatprep.subr.mxu0 0.0
        %704 = vmatpush1.xpose.msra.mxu0 %v564
        %705 = vmatprep.subr.mxu0 0.0
        %706 = vmatpush1.xpose.msra.mxu0 %v561
        %707 = vmatprep.subr.mxu0 0.0
        %708 = vmatpush1.xpose.msra.mxu0 %v558
        %709 = vmatprep.subr.mxu0 0.0
        %710 = vmatpush1.xpose.msra.mxu0 %v555
        %711 = vmatprep.subr.mxu0 0.0
        %712 = vmatpush1.xpose.msra.mxu0 %v552
        %713 = vmatprep.subr.mxu0 0.0
        %714 = vmatpush1.xpose.msra.mxu0 %v549
        %715 = vmatprep.subr.mxu0 0.0
        %716 = vmatpush1.xpose.msra.mxu0 %v546
        %717 = vmatprep.subr.mxu0 0.0
        %718 = vmatpush1.xpose.msra.mxu0 %v543
        %719 = vmatprep.subr.mxu0 0.0
        %720 = vmatpush1.xpose.msra.mxu0 %v540
        %721 = vmatprep.subr.mxu0 0.0
        %722 = vmatpush1.xpose.msra.mxu0 %v537
        %723 = vmatprep.subr.mxu0 0.0
        %724 = vmatpush1.xpose.msra.mxu0 %v534
        %725 = vmatprep.subr.mxu0 0.0
        %726 = vmatpush1.xpose.msra.mxu0 %v531
        %727 = vmatprep.subr.mxu0 0.0
        %728 = vmatpush1.xpose.msra.mxu0 %v528
        %729 = vmatprep.subr.mxu0 0.0
        %730 = vmatpush1.xpose.msra.mxu0 %v525
        %731 = vmatprep.subr.mxu0 0.0
        %732 = vmatpush1.xpose.msra.mxu0 %v522
        %733 = vmatprep.subr.mxu0 0.0
        %734 = vmatpush1.xpose.msra.mxu0 %v519
        %735 = vmatprep.subr.mxu0 0.0
        %736 = vmatpush2.xpose.msra.mxu0 %v612
        %737 = vmatprep.subr.mxu0 0.0
        %738 = vmatpush2.xpose.msra.mxu0 %v609
        %739 = vmatprep.subr.mxu0 0.0
        %740 = vmatpush2.xpose.msra.mxu0 %v606
        %741 = vmatprep.subr.mxu0 0.0
        %742 = vmatpush2.xpose.msra.mxu0 %v603
        %743 = vmatprep.subr.mxu0 0.0
        %744 = vmatpush2.xpose.msra.mxu0 %v600
        %745 = vmatprep.subr.mxu0 0.0
        %746 = vmatpush2.xpose.msra.mxu0 %v597
        %747 = vmatprep.subr.mxu0 0.0
        %748 = vmatpush2.xpose.msra.mxu0 %v594
        %749 = vmatprep.subr.mxu0 0.0
        %750 = vmatpush2.xpose.msra.mxu0 %v591
        %751 = vmatprep.subr.mxu0 0.0
        %752 = vmatpush2.xpose.msra.mxu0 %v588
        %753 = vmatprep.subr.mxu0 0.0
        %754 = vmatpush2.xpose.msra.mxu0 %v585
        %755 = vmatprep.subr.mxu0 0.0
        %756 = vmatpush2.xpose.msra.mxu0 %v582
        %757 = vmatprep.subr.mxu0 0.0
        %758 = vmatpush2.xpose.msra.mxu0 %v579
        %759 = vmatprep.subr.mxu0 0.0
        %760 = vmatpush2.xpose.msra.mxu0 %v576
        %761 = vmatprep.subr.mxu0 0.0
        %762 = vmatpush2.xpose.msra.mxu0 %v573
        %763 = vmatprep.subr.mxu0 0.0
        %764 = vmatpush2.xpose.msra.mxu0 %v570
        %765 = vmatprep.subr.mxu0 0.0
        %766 = vmatpush2.xpose.msra.mxu0 %v567
        %767 = vmatprep.mubr.f32.mxu0 0.0
        %768 = vmatmul.mubr.f32.gmra.mxu0 %v411
        %v769 = vpop.f32.mrf.mxu0
        %v770 = vadd.f32 %v392, %v769
        %v771 = vpop.f32.mrf.mxu0
        %v772 = vadd.f32 %v392, %v771
        %773 = vmatprep.mubr.f32.mxu0 0.0
        %774 = vmatmul.mubr.f32.gmra.mxu0 %v414
        %v775 = vpop.f32.mrf.mxu0
        %v776 = vadd.f32 %v397, %v775
        %v777 = vpop.f32.mrf.mxu0
        %v778 = vadd.f32 %v397, %v777
        %779 = vmatprep.mubr.f32.mxu0 0.0
        %780 = vmatmul.mubr.f32.gmra.mxu0 %v417
        %v781 = vpop.f32.mrf.mxu0
        %v782 = vadd.f32 %v402, %v781
        %v783 = vpop.f32.mrf.mxu0
        %v784 = vadd.f32 %v402, %v783
        %785 = vmatprep.mubr.f32.mxu0 0.0
        %786 = vmatmul.mubr.f32.gmra.mxu0 %v420
        %v787 = vpop.f32.mrf.mxu0
        %v788 = vadd.f32 %v407, %v787
        %v789 = vpop.f32.mrf.mxu0
        %v790 = vadd.f32 %v407, %v789
        %791 = vdwg.mxu0
        %v792 = vmax.f32 %v681, 0.0
        %v793 = vmax.f32 %v683, 0.0
        %v794 = vmax.f32 %v770, 0.0
        %v795 = vmax.f32 %v772, 0.0
        %v796 = vmax.f32 %v687, 0.0
        %v797 = vmax.f32 %v689, 0.0
        %v798 = vmax.f32 %v776, 0.0
        %v799 = vmax.f32 %v778, 0.0
        %v800 = vmax.f32 %v693, 0.0
        %v801 = vmax.f32 %v695, 0.0
        %v802 = vmax.f32 %v782, 0.0
        %v803 = vmax.f32 %v784, 0.0
        %v804 = vmax.f32 %v699, 0.0
        %v805 = vmax.f32 %v701, 0.0
        %v806 = vmax.f32 %v788, 0.0
        %v807 = vmax.f32 %v790, 0.0
        %808 = vset.pattern.permute.xlu0 1
        %809 = vperm.xlu0 %808, %v321
        %v810 = vpop.permute.xlu0 %809
        %812 = vset.pattern.permute.xlu0 1
        %813 = vperm.xlu0 %812, %v322
        %v814 = vpop.permute.xlu0 %813
        %816 = vset.pattern.permute.xlu0 1
        %817 = vperm.xlu0 %816, %v323
        %v818 = vpop.permute.xlu0 %817
        %820 = vset.pattern.permute.xlu0 1
        %821 = vperm.xlu0 %820, %v324
        %v822 = vpop.permute.xlu0 %821
        %vm824 = vcmask 261120
        %v826 = vsel %vm824, %v308, 0
        %v829 = vsel %vm824, %v309, 0
        %v832 = vsel %vm824, %v310, 0
        %v835 = vsel %vm824, %v311, 0
        %837 = vmatprep.subr.mxu0 0.0
        %838 = vmatpush1.msra.mxu0 0.0
        %839 = vmatprep.subr.mxu0 0.0
        %840 = vmatpush1.msra.mxu0 0.0
        %841 = vmatprep.subr.mxu0 0.0
        %842 = vmatpush1.msra.mxu0 0.0
        %843 = vmatprep.subr.mxu0 0.0
        %844 = vmatpush1.msra.mxu0 0.0
        %845 = vmatprep.subr.mxu0 0.0
        %846 = vmatpush1.msra.mxu0 0.0
        %847 = vmatprep.subr.mxu0 0.0
        %848 = vmatpush1.msra.mxu0 0.0
        %849 = vmatprep.subr.mxu0 0.0
        %850 = vmatpush1.msra.mxu0 0.0
        %851 = vmatprep.subr.mxu0 0.0
        %852 = vmatpush1.msra.mxu0 0.0
        %853 = vmatprep.subr.mxu0 0.0
        %854 = vmatpush1.msra.mxu0 0.0
        %855 = vmatprep.subr.mxu0 0.0
        %856 = vmatpush1.msra.mxu0 0.0
        %857 = vmatprep.subr.mxu0 0.0
        %858 = vmatpush1.msra.mxu0 0.0
        %859 = vmatprep.subr.mxu0 0.0
        %860 = vmatpush1.msra.mxu0 0.0
        %861 = vmatprep.subr.mxu0 %v805
        %862 = vmatpush1.msra.mxu0 %v804
        %863 = vmatprep.subr.mxu0 %v801
        %864 = vmatpush1.msra.mxu0 %v800
        %865 = vmatprep.subr.mxu0 %v797
        %866 = vmatpush1.msra.mxu0 %v796
        %867 = vmatprep.subr.mxu0 %v793
        %868 = vmatpush1.msra.mxu0 %v792
        %869 = vmatprep.subr.mxu0 0.0
        %870 = vmatpush2.msra.mxu0 0.0
        %871 = vmatprep.subr.mxu0 0.0
        %872 = vmatpush2.msra.mxu0 0.0
        %873 = vmatprep.subr.mxu0 0.0
        %874 = vmatpush2.msra.mxu0 0.0
        %875 = vmatprep.subr.mxu0 0.0
        %876 = vmatpush2.msra.mxu0 0.0
        %877 = vmatprep.subr.mxu0 0.0
        %878 = vmatpush2.msra.mxu0 0.0
        %879 = vmatprep.subr.mxu0 0.0
        %880 = vmatpush2.msra.mxu0 0.0
        %881 = vmatprep.subr.mxu0 0.0
        %882 = vmatpush2.msra.mxu0 0.0
        %883 = vmatprep.subr.mxu0 0.0
        %884 = vmatpush2.msra.mxu0 0.0
        %885 = vmatprep.subr.mxu0 0.0
        %886 = vmatpush2.msra.mxu0 0.0
        %887 = vmatprep.subr.mxu0 0.0
        %888 = vmatpush2.msra.mxu0 0.0
        %889 = vmatprep.subr.mxu0 0.0
        %890 = vmatpush2.msra.mxu0 0.0
        %891 = vmatprep.subr.mxu0 0.0
        %892 = vmatpush2.msra.mxu0 0.0
        %893 = vmatprep.subr.mxu0 0.0
        %894 = vmatpush2.msra.mxu0 0.0
        %895 = vmatprep.subr.mxu0 0.0
        %896 = vmatpush2.msra.mxu0 0.0
        %897 = vmatprep.subr.mxu0 0.0
        %898 = vmatpush2.msra.mxu0 0.0
        %899 = vmatprep.subr.mxu0 0.0
        %900 = vmatpush2.msra.mxu0 0.0
        %901 = vmatprep.mubr.f32.mxu0 0.0
        %902 = vmatmul.mubr.f32.gmra.mxu0 %v826
        %v903 = vpop.f32.mrf.mxu0
        %v904 = vadd.f32 %v810, %v903
        %v905 = vpop.f32.mrf.mxu0
        %v906 = vadd.f32 %v810, %v905
        %907 = vmatprep.mubr.f32.mxu0 0.0
        %908 = vmatmul.mubr.f32.gmra.mxu0 %v829
        %v909 = vpop.f32.mrf.mxu0
        %v910 = vadd.f32 %v814, %v909
        %v911 = vpop.f32.mrf.mxu0
        %v912 = vadd.f32 %v814, %v911
        %913 = vmatprep.mubr.f32.mxu0 0.0
        %914 = vmatmul.mubr.f32.gmra.mxu0 %v832
        %v915 = vpop.f32.mrf.mxu0
        %v916 = vadd.f32 %v818, %v915
        %v917 = vpop.f32.mrf.mxu0
        %v918 = vadd.f32 %v818, %v917
        %919 = vmatprep.mubr.f32.mxu0 0.0
        %920 = vmatmul.mubr.f32.gmra.mxu0 %v835
        %v921 = vpop.f32.mrf.mxu0
        %v922 = vadd.f32 %v822, %v921
        %v923 = vpop.f32.mrf.mxu0
        %v924 = vadd.f32 %v822, %v923
        %925 = vdwg.mxu0
        %926 = vmatprep.subr.mxu0 0.0
        %927 = vmatpush1.msra.mxu0 0.0
        %928 = vmatprep.subr.mxu0 0.0
        %929 = vmatpush1.msra.mxu0 0.0
        %930 = vmatprep.subr.mxu0 0.0
        %931 = vmatpush1.msra.mxu0 0.0
        %932 = vmatprep.subr.mxu0 0.0
        %933 = vmatpush1.msra.mxu0 0.0
        %934 = vmatprep.subr.mxu0 0.0
        %935 = vmatpush1.msra.mxu0 0.0
        %936 = vmatprep.subr.mxu0 0.0
        %937 = vmatpush1.msra.mxu0 0.0
        %938 = vmatprep.subr.mxu0 0.0
        %939 = vmatpush1.msra.mxu0 0.0
        %940 = vmatprep.subr.mxu0 0.0
        %941 = vmatpush1.msra.mxu0 0.0
        %942 = vmatprep.subr.mxu0 0.0
        %943 = vmatpush1.msra.mxu0 0.0
        %944 = vmatprep.subr.mxu0 0.0
        %945 = vmatpush1.msra.mxu0 0.0
        %946 = vmatprep.subr.mxu0 0.0
        %947 = vmatpush1.msra.mxu0 0.0
        %948 = vmatprep.subr.mxu0 0.0
        %949 = vmatpush1.msra.mxu0 0.0
        %950 = vmatprep.subr.mxu0 %v807
        %951 = vmatpush1.msra.mxu0 %v806
        %952 = vmatprep.subr.mxu0 %v803
        %953 = vmatpush1.msra.mxu0 %v802
        %954 = vmatprep.subr.mxu0 %v799
        %955 = vmatpush1.msra.mxu0 %v798
        %956 = vmatprep.subr.mxu0 %v795
        %957 = vmatpush1.msra.mxu0 %v794
        %958 = vmatprep.subr.mxu0 0.0
        %959 = vmatpush2.msra.mxu0 0.0
        %960 = vmatprep.subr.mxu0 0.0
        %961 = vmatpush2.msra.mxu0 0.0
        %962 = vmatprep.subr.mxu0 0.0
        %963 = vmatpush2.msra.mxu0 0.0
        %964 = vmatprep.subr.mxu0 0.0
        %965 = vmatpush2.msra.mxu0 0.0
        %966 = vmatprep.subr.mxu0 0.0
        %967 = vmatpush2.msra.mxu0 0.0
        %968 = vmatprep.subr.mxu0 0.0
        %969 = vmatpush2.msra.mxu0 0.0
        %970 = vmatprep.subr.mxu0 0.0
        %971 = vmatpush2.msra.mxu0 0.0
        %972 = vmatprep.subr.mxu0 0.0
        %973 = vmatpush2.msra.mxu0 0.0
        %974 = vmatprep.subr.mxu0 0.0
        %975 = vmatpush2.msra.mxu0 0.0
        %976 = vmatprep.subr.mxu0 0.0
        %977 = vmatpush2.msra.mxu0 0.0
        %978 = vmatprep.subr.mxu0 0.0
        %979 = vmatpush2.msra.mxu0 0.0
        %980 = vmatprep.subr.mxu0 0.0
        %981 = vmatpush2.msra.mxu0 0.0
        %982 = vmatprep.subr.mxu0 0.0
        %983 = vmatpush2.msra.mxu0 0.0
        %984 = vmatprep.subr.mxu0 0.0
        %985 = vmatpush2.msra.mxu0 0.0
        %986 = vmatprep.subr.mxu0 0.0
        %987 = vmatpush2.msra.mxu0 0.0
        %988 = vmatprep.subr.mxu0 0.0
        %989 = vmatpush2.msra.mxu0 0.0
        %990 = vmatprep.mubr.f32.mxu0 0.0
        %991 = vmatmul.mubr.f32.gmra.mxu0 %v826
        %v992 = vpop.f32.mrf.mxu0
        %v993 = vadd.f32 %v810, %v992
        %v994 = vpop.f32.mrf.mxu0
        %v995 = vadd.f32 %v810, %v994
        %996 = vmatprep.mubr.f32.mxu0 0.0
        %997 = vmatmul.mubr.f32.gmra.mxu0 %v829
        %v998 = vpop.f32.mrf.mxu0
        %v999 = vadd.f32 %v814, %v998
        %v1000 = vpop.f32.mrf.mxu0
        %v1001 = vadd.f32 %v814, %v1000
        %1002 = vmatprep.mubr.f32.mxu0 0.0
        %1003 = vmatmul.mubr.f32.gmra.mxu0 %v832
        %v1004 = vpop.f32.mrf.mxu0
        %v1005 = vadd.f32 %v818, %v1004
        %v1006 = vpop.f32.mrf.mxu0
        %v1007 = vadd.f32 %v818, %v1006
        %1008 = vmatprep.mubr.f32.mxu0 0.0
        %1009 = vmatmul.mubr.f32.gmra.mxu0 %v835
        %v1010 = vpop.f32.mrf.mxu0
        %v1011 = vadd.f32 %v822, %v1010
        %v1012 = vpop.f32.mrf.mxu0
        %v1013 = vadd.f32 %v822, %v1012
        %1014 = vdwg.mxu0
        %v1015 = vmax.f32 %v904, 0.0
        %v1016 = vmax.f32 %v906, 0.0
        %v1017 = vmax.f32 %v993, 0.0
        %v1018 = vmax.f32 %v995, 0.0
        %v1019 = vmax.f32 %v910, 0.0
        %v1020 = vmax.f32 %v912, 0.0
        %v1021 = vmax.f32 %v999, 0.0
        %v1022 = vmax.f32 %v1001, 0.0
        %v1023 = vmax.f32 %v916, 0.0
        %v1024 = vmax.f32 %v918, 0.0
        %v1025 = vmax.f32 %v1005, 0.0
        %v1026 = vmax.f32 %v1007, 0.0
        %v1027 = vmax.f32 %v922, 0.0
        %v1028 = vmax.f32 %v924, 0.0
        %v1029 = vmax.f32 %v1011, 0.0
        %v1030 = vmax.f32 %v1013, 0.0
        %1031 = vset.pattern.permute.xlu0 2
        %1032 = vperm.xlu0 %1031, %v321
        %v1033 = vpop.permute.xlu0 %1032
        %1035 = vset.pattern.permute.xlu0 2
        %1036 = vperm.xlu0 %1035, %v322
        %v1037 = vpop.permute.xlu0 %1036
        %1039 = vset.pattern.permute.xlu0 2
        %1040 = vperm.xlu0 %1039, %v323
        %v1041 = vpop.permute.xlu0 %1040
        %1043 = vset.pattern.permute.xlu0 2
        %1044 = vperm.xlu0 %1043, %v324
        %v1045 = vpop.permute.xlu0 %1044
        %v1048 = vsel %vm824, %v312, 0
        %v1051 = vsel %vm824, %v313, 0
        %v1054 = vsel %vm824, %v314, 0
        %v1057 = vsel %vm824, %v315, 0
        %1059 = vmatprep.subr.mxu0 0.0
        %1060 = vmatpush1.msra.mxu0 0.0
        %1061 = vmatprep.subr.mxu0 0.0
        %1062 = vmatpush1.msra.mxu0 0.0
        %1063 = vmatprep.subr.mxu0 0.0
        %1064 = vmatpush1.msra.mxu0 0.0
        %1065 = vmatprep.subr.mxu0 0.0
        %1066 = vmatpush1.msra.mxu0 0.0
        %1067 = vmatprep.subr.mxu0 0.0
        %1068 = vmatpush1.msra.mxu0 0.0
        %1069 = vmatprep.subr.mxu0 0.0
        %1070 = vmatpush1.msra.mxu0 0.0
        %1071 = vmatprep.subr.mxu0 0.0
        %1072 = vmatpush1.msra.mxu0 0.0
        %1073 = vmatprep.subr.mxu0 0.0
        %1074 = vmatpush1.msra.mxu0 0.0
        %1075 = vmatprep.subr.mxu0 0.0
        %1076 = vmatpush1.msra.mxu0 0.0
        %1077 = vmatprep.subr.mxu0 0.0
        %1078 = vmatpush1.msra.mxu0 0.0
        %1079 = vmatprep.subr.mxu0 0.0
        %1080 = vmatpush1.msra.mxu0 0.0
        %1081 = vmatprep.subr.mxu0 0.0
        %1082 = vmatpush1.msra.mxu0 0.0
        %1083 = vmatprep.subr.mxu0 %v1028
        %1084 = vmatpush1.msra.mxu0 %v1027
        %1085 = vmatprep.subr.mxu0 %v1024
        %1086 = vmatpush1.msra.mxu0 %v1023
        %1087 = vmatprep.subr.mxu0 %v1020
        %1088 = vmatpush1.msra.mxu0 %v1019
        %1089 = vmatprep.subr.mxu0 %v1016
        %1090 = vmatpush1.msra.mxu0 %v1015
        %1091 = vmatprep.subr.mxu0 0.0
        %1092 = vmatpush2.msra.mxu0 0.0
        %1093 = vmatprep.subr.mxu0 0.0
        %1094 = vmatpush2.msra.mxu0 0.0
        %1095 = vmatprep.subr.mxu0 0.0
        %1096 = vmatpush2.msra.mxu0 0.0
        %1097 = vmatprep.subr.mxu0 0.0
        %1098 = vmatpush2.msra.mxu0 0.0
        %1099 = vmatprep.subr.mxu0 0.0
        %1100 = vmatpush2.msra.mxu0 0.0
        %1101 = vmatprep.subr.mxu0 0.0
        %1102 = vmatpush2.msra.mxu0 0.0
        %1103 = vmatprep.subr.mxu0 0.0
        %1104 = vmatpush2.msra.mxu0 0.0
        %1105 = vmatprep.subr.mxu0 0.0
        %1106 = vmatpush2.msra.mxu0 0.0
        %1107 = vmatprep.subr.mxu0 0.0
        %1108 = vmatpush2.msra.mxu0 0.0
        %1109 = vmatprep.subr.mxu0 0.0
        %1110 = vmatpush2.msra.mxu0 0.0
        %1111 = vmatprep.subr.mxu0 0.0
        %1112 = vmatpush2.msra.mxu0 0.0
        %1113 = vmatprep.subr.mxu0 0.0
        %1114 = vmatpush2.msra.mxu0 0.0
        %1115 = vmatprep.subr.mxu0 0.0
        %1116 = vmatpush2.msra.mxu0 0.0
        %1117 = vmatprep.subr.mxu0 0.0
        %1118 = vmatpush2.msra.mxu0 0.0
        %1119 = vmatprep.subr.mxu0 0.0
        %1120 = vmatpush2.msra.mxu0 0.0
        %1121 = vmatprep.subr.mxu0 0.0
        %1122 = vmatpush2.msra.mxu0 0.0
        %1123 = vmatprep.mubr.f32.mxu0 0.0
        %1124 = vmatmul.mubr.f32.gmra.mxu0 %v1048
        %v1125 = vpop.f32.mrf.mxu0
        %v1126 = vadd.f32 %v1033, %v1125
        %v1127 = vpop.f32.mrf.mxu0
        %v1128 = vadd.f32 %v1033, %v1127
        %1129 = vmatprep.mubr.f32.mxu0 0.0
        %1130 = vmatmul.mubr.f32.gmra.mxu0 %v1051
        %v1131 = vpop.f32.mrf.mxu0
        %v1132 = vadd.f32 %v1037, %v1131
        %v1133 = vpop.f32.mrf.mxu0
        %v1134 = vadd.f32 %v1037, %v1133
        %1135 = vmatprep.mubr.f32.mxu0 0.0
        %1136 = vmatmul.mubr.f32.gmra.mxu0 %v1054
        %v1137 = vpop.f32.mrf.mxu0
        %v1138 = vadd.f32 %v1041, %v1137
        %v1139 = vpop.f32.mrf.mxu0
        %v1140 = vadd.f32 %v1041, %v1139
        %1141 = vmatprep.mubr.f32.mxu0 0.0
        %1142 = vmatmul.mubr.f32.gmra.mxu0 %v1057
        %v1143 = vpop.f32.mrf.mxu0
        %v1144 = vadd.f32 %v1045, %v1143
        %v1145 = vpop.f32.mrf.mxu0
        %v1146 = vadd.f32 %v1045, %v1145
        %1147 = vdwg.mxu0
        %1148 = vmatprep.subr.mxu0 0.0
        %1149 = vmatpush1.msra.mxu0 0.0
        %1150 = vmatprep.subr.mxu0 0.0
        %1151 = vmatpush1.msra.mxu0 0.0
        %1152 = vmatprep.subr.mxu0 0.0
        %1153 = vmatpush1.msra.mxu0 0.0
        %1154 = vmatprep.subr.mxu0 0.0
        %1155 = vmatpush1.msra.mxu0 0.0
        %1156 = vmatprep.subr.mxu0 0.0
        %1157 = vmatpush1.msra.mxu0 0.0
        %1158 = vmatprep.subr.mxu0 0.0
        %1159 = vmatpush1.msra.mxu0 0.0
        %1160 = vmatprep.subr.mxu0 0.0
        %1161 = vmatpush1.msra.mxu0 0.0
        %1162 = vmatprep.subr.mxu0 0.0
        %1163 = vmatpush1.msra.mxu0 0.0
        %1164 = vmatprep.subr.mxu0 0.0
        %1165 = vmatpush1.msra.mxu0 0.0
        %1166 = vmatprep.subr.mxu0 0.0
        %1167 = vmatpush1.msra.mxu0 0.0
        %1168 = vmatprep.subr.mxu0 0.0
        %1169 = vmatpush1.msra.mxu0 0.0
        %1170 = vmatprep.subr.mxu0 0.0
        %1171 = vmatpush1.msra.mxu0 0.0
        %1172 = vmatprep.subr.mxu0 %v1030
        %1173 = vmatpush1.msra.mxu0 %v1029
        %1174 = vmatprep.subr.mxu0 %v1026
        %1175 = vmatpush1.msra.mxu0 %v1025
        %1176 = vmatprep.subr.mxu0 %v1022
        %1177 = vmatpush1.msra.mxu0 %v1021
        %1178 = vmatprep.subr.mxu0 %v1018
        %1179 = vmatpush1.msra.mxu0 %v1017
        %1180 = vmatprep.subr.mxu0 0.0
        %1181 = vmatpush2.msra.mxu0 0.0
        %1182 = vmatprep.subr.mxu0 0.0
        %1183 = vmatpush2.msra.mxu0 0.0
        %1184 = vmatprep.subr.mxu0 0.0
        %1185 = vmatpush2.msra.mxu0 0.0
        %1186 = vmatprep.subr.mxu0 0.0
        %1187 = vmatpush2.msra.mxu0 0.0
        %1188 = vmatprep.subr.mxu0 0.0
        %1189 = vmatpush2.msra.mxu0 0.0
        %1190 = vmatprep.subr.mxu0 0.0
        %1191 = vmatpush2.msra.mxu0 0.0
        %1192 = vmatprep.subr.mxu0 0.0
        %1193 = vmatpush2.msra.mxu0 0.0
        %1194 = vmatprep.subr.mxu0 0.0
        %1195 = vmatpush2.msra.mxu0 0.0
        %1196 = vmatprep.subr.mxu0 0.0
        %1197 = vmatpush2.msra.mxu0 0.0
        %1198 = vmatprep.subr.mxu0 0.0
        %1199 = vmatpush2.msra.mxu0 0.0
        %1200 = vmatprep.subr.mxu0 0.0
        %1201 = vmatpush2.msra.mxu0 0.0
        %1202 = vmatprep.subr.mxu0 0.0
        %1203 = vmatpush2.msra.mxu0 0.0
        %1204 = vmatprep.subr.mxu0 0.0
        %1205 = vmatpush2.msra.mxu0 0.0
        %1206 = vmatprep.subr.mxu0 0.0
        %1207 = vmatpush2.msra.mxu0 0.0
        %1208 = vmatprep.subr.mxu0 0.0
        %1209 = vmatpush2.msra.mxu0 0.0
        %1210 = vmatprep.subr.mxu0 0.0
        %1211 = vmatpush2.msra.mxu0 0.0
        %1212 = vmatprep.mubr.f32.mxu0 0.0
        %1213 = vmatmul.mubr.f32.gmra.mxu0 %v1048
        %v1214 = vpop.f32.mrf.mxu0
        %v1215 = vadd.f32 %v1033, %v1214
        %v1216 = vpop.f32.mrf.mxu0
        %v1217 = vadd.f32 %v1033, %v1216
        %1218 = vmatprep.mubr.f32.mxu0 0.0
        %1219 = vmatmul.mubr.f32.gmra.mxu0 %v1051
        %v1220 = vpop.f32.mrf.mxu0
        %v1221 = vadd.f32 %v1037, %v1220
        %v1222 = vpop.f32.mrf.mxu0
        %v1223 = vadd.f32 %v1037, %v1222
        %1224 = vmatprep.mubr.f32.mxu0 0.0
        %1225 = vmatmul.mubr.f32.gmra.mxu0 %v1054
        %v1226 = vpop.f32.mrf.mxu0
        %v1227 = vadd.f32 %v1041, %v1226
        %v1228 = vpop.f32.mrf.mxu0
        %v1229 = vadd.f32 %v1041, %v1228
        %1230 = vmatprep.mubr.f32.mxu0 0.0
        %1231 = vmatmul.mubr.f32.gmra.mxu0 %v1057
        %v1232 = vpop.f32.mrf.mxu0
        %v1233 = vadd.f32 %v1045, %v1232
        %v1234 = vpop.f32.mrf.mxu0
        %v1235 = vadd.f32 %v1045, %v1234
        %1236 = vdwg.mxu0
        %v1237 = vmax.f32 %v1126, 0.0
        %v1238 = vmax.f32 %v1128, 0.0
        %v1239 = vmax.f32 %v1215, 0.0
        %v1240 = vmax.f32 %v1217, 0.0
        %v1241 = vmax.f32 %v1132, 0.0
        %v1242 = vmax.f32 %v1134, 0.0
        %v1243 = vmax.f32 %v1221, 0.0
        %v1244 = vmax.f32 %v1223, 0.0
        %v1245 = vmax.f32 %v1138, 0.0
        %v1246 = vmax.f32 %v1140, 0.0
        %v1247 = vmax.f32 %v1227, 0.0
        %v1248 = vmax.f32 %v1229, 0.0
        %v1249 = vmax.f32 %v1144, 0.0
        %v1250 = vmax.f32 %v1146, 0.0
        %v1251 = vmax.f32 %v1233, 0.0
        %v1252 = vmax.f32 %v1235, 0.0
        %1253 = vset.pattern.permute.xlu0 3
        %1254 = vperm.xlu0 %1253, %v321
        %v1255 = vpop.permute.xlu0 %1254
        %1257 = vset.pattern.permute.xlu0 3
        %1258 = vperm.xlu0 %1257, %v322
        %v1259 = vpop.permute.xlu0 %1258
        %1261 = vset.pattern.permute.xlu0 3
        %1262 = vperm.xlu0 %1261, %v323
        %v1263 = vpop.permute.xlu0 %1262
        %1265 = vset.pattern.permute.xlu0 3
        %1266 = vperm.xlu0 %1265, %v324
        %v1267 = vpop.permute.xlu0 %1266
        %v1270 = vsel %vm824, %v316, 0
        %v1273 = vsel %vm824, %v317, 0
        %v1276 = vsel %vm824, %v318, 0
        %v1279 = vsel %vm824, %v319, 0
        %1281 = vmatprep.subr.mxu0 0.0
        %1282 = vmatpush1.msra.mxu0 0.0
        %1283 = vmatprep.subr.mxu0 0.0
        %1284 = vmatpush1.msra.mxu0 0.0
        %1285 = vmatprep.subr.mxu0 0.0
        %1286 = vmatpush1.msra.mxu0 0.0
        %1287 = vmatprep.subr.mxu0 0.0
        %1288 = vmatpush1.msra.mxu0 0.0
        %1289 = vmatprep.subr.mxu0 0.0
        %1290 = vmatpush1.msra.mxu0 0.0
        %1291 = vmatprep.subr.mxu0 0.0
        %1292 = vmatpush1.msra.mxu0 0.0
        %1293 = vmatprep.subr.mxu0 0.0
        %1294 = vmatpush1.msra.mxu0 0.0
        %1295 = vmatprep.subr.mxu0 0.0
        %1296 = vmatpush1.msra.mxu0 0.0
        %1297 = vmatprep.subr.mxu0 0.0
        %1298 = vmatpush1.msra.mxu0 0.0
        %1299 = vmatprep.subr.mxu0 0.0
        %1300 = vmatpush1.msra.mxu0 0.0
        %1301 = vmatprep.subr.mxu0 0.0
        %1302 = vmatpush1.msra.mxu0 0.0
        %1303 = vmatprep.subr.mxu0 0.0
        %1304 = vmatpush1.msra.mxu0 0.0
        %1305 = vmatprep.subr.mxu0 %v1250
        %1306 = vmatpush1.msra.mxu0 %v1249
        %1307 = vmatprep.subr.mxu0 %v1246
        %1308 = vmatpush1.msra.mxu0 %v1245
        %1309 = vmatprep.subr.mxu0 %v1242
        %1310 = vmatpush1.msra.mxu0 %v1241
        %1311 = vmatprep.subr.mxu0 %v1238
        %1312 = vmatpush1.msra.mxu0 %v1237
        %1313 = vmatprep.subr.mxu0 0.0
        %1314 = vmatpush2.msra.mxu0 0.0
        %1315 = vmatprep.subr.mxu0 0.0
        %1316 = vmatpush2.msra.mxu0 0.0
        %1317 = vmatprep.subr.mxu0 0.0
        %1318 = vmatpush2.msra.mxu0 0.0
        %1319 = vmatprep.subr.mxu0 0.0
        %1320 = vmatpush2.msra.mxu0 0.0
        %1321 = vmatprep.subr.mxu0 0.0
        %1322 = vmatpush2.msra.mxu0 0.0
        %1323 = vmatprep.subr.mxu0 0.0
        %1324 = vmatpush2.msra.mxu0 0.0
        %1325 = vmatprep.subr.mxu0 0.0
        %1326 = vmatpush2.msra.mxu0 0.0
        %1327 = vmatprep.subr.mxu0 0.0
        %1328 = vmatpush2.msra.mxu0 0.0
        %1329 = vmatprep.subr.mxu0 0.0
        %1330 = vmatpush2.msra.mxu0 0.0
        %1331 = vmatprep.subr.mxu0 0.0
        %1332 = vmatpush2.msra.mxu0 0.0
        %1333 = vmatprep.subr.mxu0 0.0
        %1334 = vmatpush2.msra.mxu0 0.0
        %1335 = vmatprep.subr.mxu0 0.0
        %1336 = vmatpush2.msra.mxu0 0.0
        %1337 = vmatprep.subr.mxu0 0.0
        %1338 = vmatpush2.msra.mxu0 0.0
        %1339 = vmatprep.subr.mxu0 0.0
        %1340 = vmatpush2.msra.mxu0 0.0
        %1341 = vmatprep.subr.mxu0 0.0
        %1342 = vmatpush2.msra.mxu0 0.0
        %1343 = vmatprep.subr.mxu0 0.0
        %1344 = vmatpush2.msra.mxu0 0.0
        %1345 = vmatprep.mubr.f32.mxu0 0.0
        %1346 = vmatmul.mubr.f32.gmra.mxu0 %v1270
        %v1347 = vpop.f32.mrf.mxu0
        %v1348 = vadd.f32 %v1255, %v1347
        %v1349 = vpop.f32.mrf.mxu0
        %v1350 = vadd.f32 %v1255, %v1349
        %1351 = vmatprep.mubr.f32.mxu0 0.0
        %1352 = vmatmul.mubr.f32.gmra.mxu0 %v1273
        %v1353 = vpop.f32.mrf.mxu0
        %v1354 = vadd.f32 %v1259, %v1353
        %v1355 = vpop.f32.mrf.mxu0
        %v1356 = vadd.f32 %v1259, %v1355
        %1357 = vmatprep.mubr.f32.mxu0 0.0
        %1358 = vmatmul.mubr.f32.gmra.mxu0 %v1276
        %v1359 = vpop.f32.mrf.mxu0
        %v1360 = vadd.f32 %v1263, %v1359
        %v1361 = vpop.f32.mrf.mxu0
        %v1362 = vadd.f32 %v1263, %v1361
        %1363 = vmatprep.mubr.f32.mxu0 0.0
        %1364 = vmatmul.mubr.f32.gmra.mxu0 %v1279
        %v1365 = vpop.f32.mrf.mxu0
        %v1366 = vadd.f32 %v1267, %v1365
        %v1367 = vpop.f32.mrf.mxu0
        %v1368 = vadd.f32 %v1267, %v1367
        %1369 = vdwg.mxu0
        %1370 = vmatprep.subr.mxu0 0.0
        %1371 = vmatpush1.msra.mxu0 0.0
        %1372 = vmatprep.subr.mxu0 0.0
        %1373 = vmatpush1.msra.mxu0 0.0
        %1374 = vmatprep.subr.mxu0 0.0
        %1375 = vmatpush1.msra.mxu0 0.0
        %1376 = vmatprep.subr.mxu0 0.0
        %1377 = vmatpush1.msra.mxu0 0.0
        %1378 = vmatprep.subr.mxu0 0.0
        %1379 = vmatpush1.msra.mxu0 0.0
        %1380 = vmatprep.subr.mxu0 0.0
        %1381 = vmatpush1.msra.mxu0 0.0
        %1382 = vmatprep.subr.mxu0 0.0
        %1383 = vmatpush1.msra.mxu0 0.0
        %1384 = vmatprep.subr.mxu0 0.0
        %1385 = vmatpush1.msra.mxu0 0.0
        %1386 = vmatprep.subr.mxu0 0.0
        %1387 = vmatpush1.msra.mxu0 0.0
        %1388 = vmatprep.subr.mxu0 0.0
        %1389 = vmatpush1.msra.mxu0 0.0
        %1390 = vmatprep.subr.mxu0 0.0
        %1391 = vmatpush1.msra.mxu0 0.0
        %1392 = vmatprep.subr.mxu0 0.0
        %1393 = vmatpush1.msra.mxu0 0.0
        %1394 = vmatprep.subr.mxu0 %v1252
        %1395 = vmatpush1.msra.mxu0 %v1251
        %1396 = vmatprep.subr.mxu0 %v1248
        %1397 = vmatpush1.msra.mxu0 %v1247
        %1398 = vmatprep.subr.mxu0 %v1244
        %1399 = vmatpush1.msra.mxu0 %v1243
        %1400 = vmatprep.subr.mxu0 %v1240
        %1401 = vmatpush1.msra.mxu0 %v1239
        %1402 = vmatprep.subr.mxu0 0.0
        %1403 = vmatpush2.msra.mxu0 0.0
        %1404 = vmatprep.subr.mxu0 0.0
        %1405 = vmatpush2.msra.mxu0 0.0
        %1406 = vmatprep.subr.mxu0 0.0
        %1407 = vmatpush2.msra.mxu0 0.0
        %1408 = vmatprep.subr.mxu0 0.0
        %1409 = vmatpush2.msra.mxu0 0.0
        %1410 = vmatprep.subr.mxu0 0.0
        %1411 = vmatpush2.msra.mxu0 0.0
        %1412 = vmatprep.subr.mxu0 0.0
        %1413 = vmatpush2.msra.mxu0 0.0
        %1414 = vmatprep.subr.mxu0 0.0
        %1415 = vmatpush2.msra.mxu0 0.0
        %1416 = vmatprep.subr.mxu0 0.0
        %1417 = vmatpush2.msra.mxu0 0.0
        %1418 = vmatprep.subr.mxu0 0.0
        %1419 = vmatpush2.msra.mxu0 0.0
        %1420 = vmatprep.subr.mxu0 0.0
        %1421 = vmatpush2.msra.mxu0 0.0
        %1422 = vmatprep.subr.mxu0 0.0
        %1423 = vmatpush2.msra.mxu0 0.0
        %1424 = vmatprep.subr.mxu0 0.0
        %1425 = vmatpush2.msra.mxu0 0.0
        %1426 = vmatprep.subr.mxu0 0.0
        %1427 = vmatpush2.msra.mxu0 0.0
        %1428 = vmatprep.subr.mxu0 0.0
        %1429 = vmatpush2.msra.mxu0 0.0
        %1430 = vmatprep.subr.mxu0 0.0
        %1431 = vmatpush2.msra.mxu0 0.0
        %1432 = vmatprep.subr.mxu0 0.0
        %1433 = vmatpush2.msra.mxu0 0.0
        %1434 = vmatprep.mubr.f32.mxu0 0.0
        %1435 = vmatmul.mubr.f32.gmra.mxu0 %v1270
        %v1436 = vpop.f32.mrf.mxu0
        %v1437 = vadd.f32 %v1255, %v1436
        %v1438 = vpop.f32.mrf.mxu0
        %v1439 = vadd.f32 %v1255, %v1438
        %1440 = vmatprep.mubr.f32.mxu0 0.0
        %1441 = vmatmul.mubr.f32.gmra.mxu0 %v1273
        %v1442 = vpop.f32.mrf.mxu0
        %v1443 = vadd.f32 %v1259, %v1442
        %v1444 = vpop.f32.mrf.mxu0
        %v1445 = vadd.f32 %v1259, %v1444
        %1446 = vmatprep.mubr.f32.mxu0 0.0
        %1447 = vmatmul.mubr.f32.gmra.mxu0 %v1276
        %v1448 = vpop.f32.mrf.mxu0
        %v1449 = vadd.f32 %v1263, %v1448
        %v1450 = vpop.f32.mrf.mxu0
        %v1451 = vadd.f32 %v1263, %v1450
        %1452 = vmatprep.mubr.f32.mxu0 0.0
        %1453 = vmatmul.mubr.f32.gmra.mxu0 %v1279
        %v1454 = vpop.f32.mrf.mxu0
        %v1455 = vadd.f32 %v1267, %v1454
        %v1456 = vpop.f32.mrf.mxu0
        %v1457 = vadd.f32 %v1267, %v1456
        %1458 = vdwg.mxu0
        %v1459 = vmax.f32 %v1348, 0.0
        %v1460 = vmax.f32 %v1350, 0.0
        %v1461 = vmax.f32 %v1437, 0.0
        %v1462 = vmax.f32 %v1439, 0.0
        %v1463 = vmax.f32 %v1354, 0.0
        %v1464 = vmax.f32 %v1356, 0.0
        %v1465 = vmax.f32 %v1443, 0.0
        %v1466 = vmax.f32 %v1445, 0.0
        %v1467 = vmax.f32 %v1360, 0.0
        %v1468 = vmax.f32 %v1362, 0.0
        %v1469 = vmax.f32 %v1449, 0.0
        %v1470 = vmax.f32 %v1451, 0.0
        %v1471 = vmax.f32 %v1366, 0.0
        %v1472 = vmax.f32 %v1368, 0.0
        %v1473 = vmax.f32 %v1455, 0.0
        %v1474 = vmax.f32 %v1457, 0.0
        %1475 = vset.pattern.permute.xlu0 4
        %1476 = vperm.xlu0 %1475, %v321
        %v1477 = vpop.permute.xlu0 %1476
        %v1480 = vsel %vm824, %v320, 0
        %1482 = vmatprep.subr.mxu0 0.0
        %1483 = vmatpush1.msra.mxu0 0.0
        %1484 = vmatprep.subr.mxu0 0.0
        %1485 = vmatpush1.msra.mxu0 0.0
        %1486 = vmatprep.subr.mxu0 0.0
        %1487 = vmatpush1.msra.mxu0 0.0
        %1488 = vmatprep.subr.mxu0 0.0
        %1489 = vmatpush1.msra.mxu0 0.0
        %1490 = vmatprep.subr.mxu0 0.0
        %1491 = vmatpush1.msra.mxu0 0.0
        %1492 = vmatprep.subr.mxu0 0.0
        %1493 = vmatpush1.msra.mxu0 0.0
        %1494 = vmatprep.subr.mxu0 0.0
        %1495 = vmatpush1.msra.mxu0 0.0
        %1496 = vmatprep.subr.mxu0 0.0
        %1497 = vmatpush1.msra.mxu0 0.0
        %1498 = vmatprep.subr.mxu0 0.0
        %1499 = vmatpush1.msra.mxu0 0.0
        %1500 = vmatprep.subr.mxu0 0.0
        %1501 = vmatpush1.msra.mxu0 0.0
        %1502 = vmatprep.subr.mxu0 0.0
        %1503 = vmatpush1.msra.mxu0 0.0
        %1504 = vmatprep.subr.mxu0 0.0
        %1505 = vmatpush1.msra.mxu0 0.0
        %1506 = vmatprep.subr.mxu0 %v1472
        %1507 = vmatpush1.msra.mxu0 %v1471
        %1508 = vmatprep.subr.mxu0 %v1468
        %1509 = vmatpush1.msra.mxu0 %v1467
        %1510 = vmatprep.subr.mxu0 %v1464
        %1511 = vmatpush1.msra.mxu0 %v1463
        %1512 = vmatprep.subr.mxu0 %v1460
        %1513 = vmatpush1.msra.mxu0 %v1459
        %1514 = vmatprep.subr.mxu0 0.0
        %1515 = vmatpush2.msra.mxu0 0.0
        %1516 = vmatprep.subr.mxu0 0.0
        %1517 = vmatpush2.msra.mxu0 0.0
        %1518 = vmatprep.subr.mxu0 0.0
        %1519 = vmatpush2.msra.mxu0 0.0
        %1520 = vmatprep.subr.mxu0 0.0
        %1521 = vmatpush2.msra.mxu0 0.0
        %1522 = vmatprep.subr.mxu0 0.0
        %1523 = vmatpush2.msra.mxu0 0.0
        %1524 = vmatprep.subr.mxu0 0.0
        %1525 = vmatpush2.msra.mxu0 0.0
        %1526 = vmatprep.subr.mxu0 0.0
        %1527 = vmatpush2.msra.mxu0 0.0
        %1528 = vmatprep.subr.mxu0 0.0
        %1529 = vmatpush2.msra.mxu0 0.0
        %1530 = vmatprep.subr.mxu0 0.0
        %1531 = vmatpush2.msra.mxu0 0.0
        %1532 = vmatprep.subr.mxu0 0.0
        %1533 = vmatpush2.msra.mxu0 0.0
        %1534 = vmatprep.subr.mxu0 0.0
        %1535 = vmatpush2.msra.mxu0 0.0
        %1536 = vmatprep.subr.mxu0 0.0
        %1537 = vmatpush2.msra.mxu0 0.0
        %1538 = vmatprep.subr.mxu0 0.0
        %1539 = vmatpush2.msra.mxu0 0.0
        %1540 = vmatprep.subr.mxu0 0.0
        %1541 = vmatpush2.msra.mxu0 0.0
        %1542 = vmatprep.subr.mxu0 0.0
        %1543 = vmatpush2.msra.mxu0 0.0
        %1544 = vmatprep.subr.mxu0 0.0
        %1545 = vmatpush2.msra.mxu0 0.0
        %1546 = vmatprep.mubr.f32.mxu0 0.0
        %1547 = vmatmul.mubr.f32.gmra.mxu0 %v1480
        %v1548 = vpop.f32.mrf.mxu0
        %v1549 = vadd.f32 %v1477, %v1548
        %v1550 = vpop.f32.mrf.mxu0
        %v1551 = vadd.f32 %v1477, %v1550
        %1552 = vdwg.mxu0
        %1553 = vmatprep.subr.mxu0 0.0
        %1554 = vmatpush1.msra.mxu0 0.0
        %1555 = vmatprep.subr.mxu0 0.0
        %1556 = vmatpush1.msra.mxu0 0.0
        %1557 = vmatprep.subr.mxu0 0.0
        %1558 = vmatpush1.msra.mxu0 0.0
        %1559 = vmatprep.subr.mxu0 0.0
        %1560 = vmatpush1.msra.mxu0 0.0
        %1561 = vmatprep.subr.mxu0 0.0
        %1562 = vmatpush1.msra.mxu0 0.0
        %1563 = vmatprep.subr.mxu0 0.0
        %1564 = vmatpush1.msra.mxu0 0.0
        %1565 = vmatprep.subr.mxu0 0.0
        %1566 = vmatpush1.msra.mxu0 0.0
        %1567 = vmatprep.subr.mxu0 0.0
        %1568 = vmatpush1.msra.mxu0 0.0
        %1569 = vmatprep.subr.mxu0 0.0
        %1570 = vmatpush1.msra.mxu0 0.0
        %1571 = vmatprep.subr.mxu0 0.0
        %1572 = vmatpush1.msra.mxu0 0.0
        %1573 = vmatprep.subr.mxu0 0.0
        %1574 = vmatpush1.msra.mxu0 0.0
        %1575 = vmatprep.subr.mxu0 0.0
        %1576 = vmatpush1.msra.mxu0 0.0
        %1577 = vmatprep.subr.mxu0 %v1474
        %1578 = vmatpush1.msra.mxu0 %v1473
        %1579 = vmatprep.subr.mxu0 %v1470
        %1580 = vmatpush1.msra.mxu0 %v1469
        %1581 = vmatprep.subr.mxu0 %v1466
        %1582 = vmatpush1.msra.mxu0 %v1465
        %1583 = vmatprep.subr.mxu0 %v1462
        %1584 = vmatpush1.msra.mxu0 %v1461
        %1585 = vmatprep.subr.mxu0 0.0
        %1586 = vmatpush2.msra.mxu0 0.0
        %1587 = vmatprep.subr.mxu0 0.0
        %1588 = vmatpush2.msra.mxu0 0.0
        %1589 = vmatprep.subr.mxu0 0.0
        %1590 = vmatpush2.msra.mxu0 0.0
        %1591 = vmatprep.subr.mxu0 0.0
        %1592 = vmatpush2.msra.mxu0 0.0
        %1593 = vmatprep.subr.mxu0 0.0
        %1594 = vmatpush2.msra.mxu0 0.0
        %1595 = vmatprep.subr.mxu0 0.0
        %1596 = vmatpush2.msra.mxu0 0.0
        %1597 = vmatprep.subr.mxu0 0.0
        %1598 = vmatpush2.msra.mxu0 0.0
        %1599 = vmatprep.subr.mxu0 0.0
        %1600 = vmatpush2.msra.mxu0 0.0
        %1601 = vmatprep.subr.mxu0 0.0
        %1602 = vmatpush2.msra.mxu0 0.0
        %1603 = vmatprep.subr.mxu0 0.0
        %1604 = vmatpush2.msra.mxu0 0.0
        %1605 = vmatprep.subr.mxu0 0.0
        %1606 = vmatpush2.msra.mxu0 0.0
        %1607 = vmatprep.subr.mxu0 0.0
        %1608 = vmatpush2.msra.mxu0 0.0
        %1609 = vmatprep.subr.mxu0 0.0
        %1610 = vmatpush2.msra.mxu0 0.0
        %1611 = vmatprep.subr.mxu0 0.0
        %1612 = vmatpush2.msra.mxu0 0.0
        %1613 = vmatprep.subr.mxu0 0.0
        %1614 = vmatpush2.msra.mxu0 0.0
        %1615 = vmatprep.subr.mxu0 0.0
        %1616 = vmatpush2.msra.mxu0 0.0
        %1617 = vmatprep.mubr.f32.mxu0 0.0
        %1618 = vmatmul.mubr.f32.gmra.mxu0 %v1480
        %v1619 = vpop.f32.mrf.mxu0
        %v1620 = vadd.f32 %v1477, %v1619
        %v1621 = vpop.f32.mrf.mxu0
        %v1622 = vadd.f32 %v1477, %v1621
        %1623 = vdwg.mxu0
        %1624 = vst [vmem:[%s284] sm:$0xff] %v1549
        %1625 = vst [vmem:[%s284 + $0x8] sm:$0xff] %v1551
        %1626 = vst [vmem:[%s284 + $0x10] sm:$0xff] %v1620
        %1627 = vst [vmem:[%s284 + $0x18] sm:$0xff] %v1622
        %v1628 = vld [vmem:[%s293 + $0x200] sm:$0xff]
        %v1629 = vld [vmem:[%s293 + $0x208] sm:$0xff]
        %v1630 = vld [vmem:[%s293 + $0x210] sm:$0xff]
        %v1631 = vld [vmem:[%s293 + $0x218] sm:$0xff]
        %v1632 = vld [vmem:[%s293 + $0x220] sm:$0xff]
        %v1633 = vld [vmem:[%s293 + $0x228] sm:$0xff]
        %v1634 = vld [vmem:[%s293 + $0x230] sm:$0xff]
        %v1635 = vld [vmem:[%s293 + $0x238] sm:$0xff]
        %v1636 = vld [vmem:[%s293 + $0x240] sm:$0xff]
        %v1637 = vld [vmem:[%s293 + $0x248] sm:$0xff]
        %v1638 = vld [vmem:[%s293 + $0x250] sm:$0xff]
        %v1639 = vld [vmem:[%s293 + $0x258] sm:$0xff]
        %v1640 = vld [vmem:[%s293 + $0x260] sm:$0xff]
        %v1641 = vld [vmem:[%s293 + $0x268] sm:$0xff]
        %v1642 = vld [vmem:[%s293 + $0x270] sm:$0xff]
        %v1643 = vld [vmem:[%s293 + $0x278] sm:$0xff]
        %v1644 = vld [vmem:[%s293 + $0x280] sm:$0xff]
        %v1645 = vld [vmem:[%s293 + $0x288] sm:$0xff]
        %v1646 = vld [vmem:[%s293 + $0x290] sm:$0xff]
        %v1647 = vld [vmem:[%s293 + $0x298] sm:$0xff]
        %v1648 = vld [vmem:[%s293 + $0x2a0] sm:$0xff]
        %v1649 = vld [vmem:[%s293 + $0x2a8] sm:$0xff]
        %v1650 = vld [vmem:[%s293 + $0x2b0] sm:$0xff]
        %v1651 = vld [vmem:[%s293 + $0x2b8] sm:$0xff]
        %v1652 = vld [vmem:[%s293 + $0x2c0] sm:$0xff]
        %v1653 = vld [vmem:[%s293 + $0x2c8] sm:$0xff]
        %v1654 = vld [vmem:[%s293 + $0x2d0] sm:$0xff]
        %v1655 = vld [vmem:[%s293 + $0x2d8] sm:$0xff]
        %v1656 = vld [vmem:[%s293 + $0x2e0] sm:$0xff]
        %v1657 = vld [vmem:[%s293 + $0x2e8] sm:$0xff]
        %v1658 = vld [vmem:[%s293 + $0x2f0] sm:$0xff]
        %v1659 = vld [vmem:[%s293 + $0x2f8] sm:$0xff]
        %v1660 = vld [vmem:[%s293 + $0x300] sm:$0xff]
        %v1661 = vld [vmem:[%s293 + $0x308] sm:$0xff]
        %v1662 = vld [vmem:[%s293 + $0x310] sm:$0xff]
        %v1663 = vld [vmem:[%s293 + $0x318] sm:$0xff]
        %v1664 = vld [vmem:[%s293 + $0x320] sm:$0xff]
        %v1665 = vld [vmem:[%s293 + $0x328] sm:$0xff]
        %v1666 = vld [vmem:[%s293 + $0x330] sm:$0xff]
        %v1667 = vld [vmem:[%s293 + $0x338] sm:$0xff]
        %v1668 = vld [vmem:[%s293 + $0x340] sm:$0xff]
        %v1669 = vld [vmem:[%s293 + $0x348] sm:$0xff]
        %v1670 = vld [vmem:[%s293 + $0x350] sm:$0xff]
        %v1671 = vld [vmem:[%s293 + $0x358] sm:$0xff]
        %v1672 = vld [vmem:[%s293 + $0x360] sm:$0xff]
        %v1673 = vld [vmem:[%s293 + $0x368] sm:$0xff]
        %v1674 = vld [vmem:[%s293 + $0x370] sm:$0xff]
        %v1675 = vld [vmem:[%s293 + $0x378] sm:$0xff]
        %v1676 = vld [vmem:[%s293 + $0x380] sm:$0xff]
        %v1677 = vld [vmem:[%s293 + $0x388] sm:$0xff]
        %v1678 = vld [vmem:[%s293 + $0x390] sm:$0xff]
        %v1679 = vld [vmem:[%s293 + $0x398] sm:$0xff]
        %v1680 = vld [vmem:[%s293 + $0x3a0] sm:$0xff]
        %v1681 = vld [vmem:[%s293 + $0x3a8] sm:$0xff]
        %v1682 = vld [vmem:[%s293 + $0x3b0] sm:$0xff]
        %v1683 = vld [vmem:[%s293 + $0x3b8] sm:$0xff]
        %v1684 = vld [vmem:[%s293 + $0x3c0] sm:$0xff]
        %v1685 = vld [vmem:[%s293 + $0x3c8] sm:$0xff]
        %v1686 = vld [vmem:[%s293 + $0x3d0] sm:$0xff]
        %v1687 = vld [vmem:[%s293 + $0x3d8] sm:$0xff]
        %v1688 = vld [vmem:[%s293 + $0x3e0] sm:$0xff]
        %v1689 = vld [vmem:[%s293 + $0x3e8] sm:$0xff]
        %v1690 = vld [vmem:[%s293 + $0x3f0] sm:$0xff]
        %v1691 = vld [vmem:[%s293 + $0x3f8] sm:$0xff]
        %v1693 = vsel %vm409, %v1628, 0
        %v1696 = vsel %vm409, %v1629, 0
        %v1699 = vsel %vm409, %v1630, 0
        %v1702 = vsel %vm409, %v1631, 0
        %v1705 = vsel %vm409, %v1632, 0
        %v1708 = vsel %vm409, %v1633, 0
        %v1711 = vsel %vm409, %v1634, 0
        %v1714 = vsel %vm409, %v1635, 0
        %v1717 = vsel %vm409, %v1636, 0
        %v1720 = vsel %vm409, %v1637, 0
        %v1723 = vsel %vm409, %v1638, 0
        %v1726 = vsel %vm409, %v1639, 0
        %v1729 = vsel %vm409, %v1640, 0
        %v1732 = vsel %vm409, %v1641, 0
        %v1735 = vsel %vm409, %v1642, 0
        %v1738 = vsel %vm409, %v1643, 0
        %v1741 = vsel %vm409, %v1644, 0
        %v1744 = vsel %vm409, %v1645, 0
        %v1747 = vsel %vm409, %v1646, 0
        %v1750 = vsel %vm409, %v1647, 0
        %v1753 = vsel %vm409, %v1648, 0
        %v1756 = vsel %vm409, %v1649, 0
        %v1759 = vsel %vm409, %v1650, 0
        %v1762 = vsel %vm409, %v1651, 0
        %v1765 = vsel %vm409, %v1652, 0
        %v1768 = vsel %vm409, %v1653, 0
        %v1771 = vsel %vm409, %v1654, 0
        %v1774 = vsel %vm409, %v1655, 0
        %v1777 = vsel %vm409, %v1656, 0
        %v1780 = vsel %vm409, %v1657, 0
        %v1783 = vsel %vm409, %v1658, 0
        %v1786 = vsel %vm409, %v1659, 0
        %v1789 = vsel %vm409, %v1660, 0
        %v1792 = vsel %vm409, %v1661, 0
        %v1795 = vsel %vm409, %v1662, 0
        %v1798 = vsel %vm409, %v1663, 0
        %v1801 = vsel %vm409, %v1664, 0
        %v1804 = vsel %vm409, %v1665, 0
        %v1807 = vsel %vm409, %v1666, 0
        %v1810 = vsel %vm409, %v1667, 0
        %v1813 = vsel %vm409, %v1668, 0
        %v1816 = vsel %vm409, %v1669, 0
        %v1819 = vsel %vm409, %v1670, 0
        %v1822 = vsel %vm409, %v1671, 0
        %v1825 = vsel %vm409, %v1672, 0
        %v1828 = vsel %vm409, %v1673, 0
        %v1831 = vsel %vm409, %v1674, 0
        %v1834 = vsel %vm409, %v1675, 0
        %v1837 = vsel %vm409, %v1676, 0
        %v1840 = vsel %vm409, %v1677, 0
        %v1843 = vsel %vm409, %v1678, 0
        %v1846 = vsel %vm409, %v1679, 0
        %v1849 = vsel %vm409, %v1680, 0
        %v1852 = vsel %vm409, %v1681, 0
        %v1855 = vsel %vm409, %v1682, 0
        %v1858 = vsel %vm409, %v1683, 0
        %v1861 = vsel %vm409, %v1684, 0
        %v1864 = vsel %vm409, %v1685, 0
        %v1867 = vsel %vm409, %v1686, 0
        %v1870 = vsel %vm409, %v1687, 0
        %v1873 = vsel %vm409, %v1688, 0
        %v1876 = vsel %vm409, %v1689, 0
        %v1879 = vsel %vm409, %v1690, 0
        %v1882 = vsel %vm409, %v1691, 0
        %1884 = vmatprep.subr.mxu0 0.0
        %1885 = vmatpush1.xpose.msra.mxu0 %v1738
        %1886 = vmatprep.subr.mxu0 0.0
        %1887 = vmatpush1.xpose.msra.mxu0 %v1735
        %1888 = vmatprep.subr.mxu0 0.0
        %1889 = vmatpush1.xpose.msra.mxu0 %v1732
        %1890 = vmatprep.subr.mxu0 0.0
        %1891 = vmatpush1.xpose.msra.mxu0 %v1729
        %1892 = vmatprep.subr.mxu0 0.0
        %1893 = vmatpush1.xpose.msra.mxu0 %v1726
        %1894 = vmatprep.subr.mxu0 0.0
        %1895 = vmatpush1.xpose.msra.mxu0 %v1723
        %1896 = vmatprep.subr.mxu0 0.0
        %1897 = vmatpush1.xpose.msra.mxu0 %v1720
        %1898 = vmatprep.subr.mxu0 0.0
        %1899 = vmatpush1.xpose.msra.mxu0 %v1717
        %1900 = vmatprep.subr.mxu0 0.0
        %1901 = vmatpush1.xpose.msra.mxu0 %v1714
        %1902 = vmatprep.subr.mxu0 0.0
        %1903 = vmatpush1.xpose.msra.mxu0 %v1711
        %1904 = vmatprep.subr.mxu0 0.0
        %1905 = vmatpush1.xpose.msra.mxu0 %v1708
        %1906 = vmatprep.subr.mxu0 0.0
        %1907 = vmatpush1.xpose.msra.mxu0 %v1705
        %1908 = vmatprep.subr.mxu0 0.0
        %1909 = vmatpush1.xpose.msra.mxu0 %v1702
        %1910 = vmatprep.subr.mxu0 0.0
        %1911 = vmatpush1.xpose.msra.mxu0 %v1699
        %1912 = vmatprep.subr.mxu0 0.0
        %1913 = vmatpush1.xpose.msra.mxu0 %v1696
        %1914 = vmatprep.subr.mxu0 0.0
        %1915 = vmatpush1.xpose.msra.mxu0 %v1693
        %1916 = vmatprep.subr.mxu0 0.0
        %1917 = vmatpush2.xpose.msra.mxu0 %v1786
        %1918 = vmatprep.subr.mxu0 0.0
        %1919 = vmatpush2.xpose.msra.mxu0 %v1783
        %1920 = vmatprep.subr.mxu0 0.0
        %1921 = vmatpush2.xpose.msra.mxu0 %v1780
        %1922 = vmatprep.subr.mxu0 0.0
        %1923 = vmatpush2.xpose.msra.mxu0 %v1777
        %1924 = vmatprep.subr.mxu0 0.0
        %1925 = vmatpush2.xpose.msra.mxu0 %v1774
        %1926 = vmatprep.subr.mxu0 0.0
        %1927 = vmatpush2.xpose.msra.mxu0 %v1771
        %1928 = vmatprep.subr.mxu0 0.0
        %1929 = vmatpush2.xpose.msra.mxu0 %v1768
        %1930 = vmatprep.subr.mxu0 0.0
        %1931 = vmatpush2.xpose.msra.mxu0 %v1765
        %1932 = vmatprep.subr.mxu0 0.0
        %1933 = vmatpush2.xpose.msra.mxu0 %v1762
        %1934 = vmatprep.subr.mxu0 0.0
        %1935 = vmatpush2.xpose.msra.mxu0 %v1759
        %1936 = vmatprep.subr.mxu0 0.0
        %1937 = vmatpush2.xpose.msra.mxu0 %v1756
        %1938 = vmatprep.subr.mxu0 0.0
        %1939 = vmatpush2.xpose.msra.mxu0 %v1753
        %1940 = vmatprep.subr.mxu0 0.0
        %1941 = vmatpush2.xpose.msra.mxu0 %v1750
        %1942 = vmatprep.subr.mxu0 0.0
        %1943 = vmatpush2.xpose.msra.mxu0 %v1747
        %1944 = vmatprep.subr.mxu0 0.0
        %1945 = vmatpush2.xpose.msra.mxu0 %v1744
        %1946 = vmatprep.subr.mxu0 0.0
        %1947 = vmatpush2.xpose.msra.mxu0 %v1741
        %1948 = vmatprep.mubr.f32.mxu0 0.0
        %1949 = vmatmul.mubr.f32.gmra.mxu0 %v411
        %v1950 = vpop.f32.mrf.mxu0
        %v1951 = vadd.f32 %v392, %v1950
        %v1952 = vpop.f32.mrf.mxu0
        %v1953 = vadd.f32 %v392, %v1952
        %1954 = vmatprep.mubr.f32.mxu0 0.0
        %1955 = vmatmul.mubr.f32.gmra.mxu0 %v414
        %v1956 = vpop.f32.mrf.mxu0
        %v1957 = vadd.f32 %v397, %v1956
        %v1958 = vpop.f32.mrf.mxu0
        %v1959 = vadd.f32 %v397, %v1958
        %1960 = vmatprep.mubr.f32.mxu0 0.0
        %1961 = vmatmul.mubr.f32.gmra.mxu0 %v417
        %v1962 = vpop.f32.mrf.mxu0
        %v1963 = vadd.f32 %v402, %v1962
        %v1964 = vpop.f32.mrf.mxu0
        %v1965 = vadd.f32 %v402, %v1964
        %1966 = vmatprep.mubr.f32.mxu0 0.0
        %1967 = vmatmul.mubr.f32.gmra.mxu0 %v420
        %v1968 = vpop.f32.mrf.mxu0
        %v1969 = vadd.f32 %v407, %v1968
        %v1970 = vpop.f32.mrf.mxu0
        %v1971 = vadd.f32 %v407, %v1970
        %1972 = vdwg.mxu0
        %1973 = vmatprep.subr.mxu0 0.0
        %1974 = vmatpush1.xpose.msra.mxu0 %v1834
        %1975 = vmatprep.subr.mxu0 0.0
        %1976 = vmatpush1.xpose.msra.mxu0 %v1831
        %1977 = vmatprep.subr.mxu0 0.0
        %1978 = vmatpush1.xpose.msra.mxu0 %v1828
        %1979 = vmatprep.subr.mxu0 0.0
        %1980 = vmatpush1.xpose.msra.mxu0 %v1825
        %1981 = vmatprep.subr.mxu0 0.0
        %1982 = vmatpush1.xpose.msra.mxu0 %v1822
        %1983 = vmatprep.subr.mxu0 0.0
        %1984 = vmatpush1.xpose.msra.mxu0 %v1819
        %1985 = vmatprep.subr.mxu0 0.0
        %1986 = vmatpush1.xpose.msra.mxu0 %v1816
        %1987 = vmatprep.subr.mxu0 0.0
        %1988 = vmatpush1.xpose.msra.mxu0 %v1813
        %1989 = vmatprep.subr.mxu0 0.0
        %1990 = vmatpush1.xpose.msra.mxu0 %v1810
        %1991 = vmatprep.subr.mxu0 0.0
        %1992 = vmatpush1.xpose.msra.mxu0 %v1807
        %1993 = vmatprep.subr.mxu0 0.0
        %1994 = vmatpush1.xpose.msra.mxu0 %v1804
        %1995 = vmatprep.subr.mxu0 0.0
        %1996 = vmatpush1.xpose.msra.mxu0 %v1801
        %1997 = vmatprep.subr.mxu0 0.0
        %1998 = vmatpush1.xpose.msra.mxu0 %v1798
        %1999 = vmatprep.subr.mxu0 0.0
        %2000 = vmatpush1.xpose.msra.mxu0 %v1795
        %2001 = vmatprep.subr.mxu0 0.0
        %2002 = vmatpush1.xpose.msra.mxu0 %v1792
        %2003 = vmatprep.subr.mxu0 0.0
        %2004 = vmatpush1.xpose.msra.mxu0 %v1789
        %2005 = vmatprep.subr.mxu0 0.0
        %2006 = vmatpush2.xpose.msra.mxu0 %v1882
        %2007 = vmatprep.subr.mxu0 0.0
        %2008 = vmatpush2.xpose.msra.mxu0 %v1879
        %2009 = vmatprep.subr.mxu0 0.0
        %2010 = vmatpush2.xpose.msra.mxu0 %v1876
        %2011 = vmatprep.subr.mxu0 0.0
        %2012 = vmatpush2.xpose.msra.mxu0 %v1873
        %2013 = vmatprep.subr.mxu0 0.0
        %2014 = vmatpush2.xpose.msra.mxu0 %v1870
        %2015 = vmatprep.subr.mxu0 0.0
        %2016 = vmatpush2.xpose.msra.mxu0 %v1867
        %2017 = vmatprep.subr.mxu0 0.0
        %2018 = vmatpush2.xpose.msra.mxu0 %v1864
        %2019 = vmatprep.subr.mxu0 0.0
        %2020 = vmatpush2.xpose.msra.mxu0 %v1861
        %2021 = vmatprep.subr.mxu0 0.0
        %2022 = vmatpush2.xpose.msra.mxu0 %v1858
        %2023 = vmatprep.subr.mxu0 0.0
        %2024 = vmatpush2.xpose.msra.mxu0 %v1855
        %2025 = vmatprep.subr.mxu0 0.0
        %2026 = vmatpush2.xpose.msra.mxu0 %v1852
        %2027 = vmatprep.subr.mxu0 0.0
        %2028 = vmatpush2.xpose.msra.mxu0 %v1849
        %2029 = vmatprep.subr.mxu0 0.0
        %2030 = vmatpush2.xpose.msra.mxu0 %v1846
        %2031 = vmatprep.subr.mxu0 0.0
        %2032 = vmatpush2.xpose.msra.mxu0 %v1843
        %2033 = vmatprep.subr.mxu0 0.0
        %2034 = vmatpush2.xpose.msra.mxu0 %v1840
        %2035 = vmatprep.subr.mxu0 0.0
        %2036 = vmatpush2.xpose.msra.mxu0 %v1837
        %2037 = vmatprep.mubr.f32.mxu0 0.0
        %2038 = vmatmul.mubr.f32.gmra.mxu0 %v411
        %v2039 = vpop.f32.mrf.mxu0
        %v2040 = vadd.f32 %v392, %v2039
        %v2041 = vpop.f32.mrf.mxu0
        %v2042 = vadd.f32 %v392, %v2041
        %2043 = vmatprep.mubr.f32.mxu0 0.0
        %2044 = vmatmul.mubr.f32.gmra.mxu0 %v414
        %v2045 = vpop.f32.mrf.mxu0
        %v2046 = vadd.f32 %v397, %v2045
        %v2047 = vpop.f32.mrf.mxu0
        %v2048 = vadd.f32 %v397, %v2047
        %2049 = vmatprep.mubr.f32.mxu0 0.0
        %2050 = vmatmul.mubr.f32.gmra.mxu0 %v417
        %v2051 = vpop.f32.mrf.mxu0
        %v2052 = vadd.f32 %v402, %v2051
        %v2053 = vpop.f32.mrf.mxu0
        %v2054 = vadd.f32 %v402, %v2053
        %2055 = vmatprep.mubr.f32.mxu0 0.0
        %2056 = vmatmul.mubr.f32.gmra.mxu0 %v420
        %v2057 = vpop.f32.mrf.mxu0
        %v2058 = vadd.f32 %v407, %v2057
        %v2059 = vpop.f32.mrf.mxu0
        %v2060 = vadd.f32 %v407, %v2059
        %2061 = vdwg.mxu0
        %v2062 = vmax.f32 %v1951, 0.0
        %v2063 = vmax.f32 %v1953, 0.0
        %v2064 = vmax.f32 %v2040, 0.0
        %v2065 = vmax.f32 %v2042, 0.0
        %v2066 = vmax.f32 %v1957, 0.0
        %v2067 = vmax.f32 %v1959, 0.0
        %v2068 = vmax.f32 %v2046, 0.0
        %v2069 = vmax.f32 %v2048, 0.0
        %v2070 = vmax.f32 %v1963, 0.0
        %v2071 = vmax.f32 %v1965, 0.0
        %v2072 = vmax.f32 %v2052, 0.0
        %v2073 = vmax.f32 %v2054, 0.0
        %v2074 = vmax.f32 %v1969, 0.0
        %v2075 = vmax.f32 %v1971, 0.0
        %v2076 = vmax.f32 %v2058, 0.0
        %v2077 = vmax.f32 %v2060, 0.0
        %2078 = vmatprep.subr.mxu0 0.0
        %2079 = vmatpush1.msra.mxu0 0.0
        %2080 = vmatprep.subr.mxu0 0.0
        %2081 = vmatpush1.msra.mxu0 0.0
        %2082 = vmatprep.subr.mxu0 0.0
        %2083 = vmatpush1.msra.mxu0 0.0
        %2084 = vmatprep.subr.mxu0 0.0
        %2085 = vmatpush1.msra.mxu0 0.0
        %2086 = vmatprep.subr.mxu0 0.0
        %2087 = vmatpush1.msra.mxu0 0.0
        %2088 = vmatprep.subr.mxu0 0.0
        %2089 = vmatpush1.msra.mxu0 0.0
        %2090 = vmatprep.subr.mxu0 0.0
        %2091 = vmatpush1.msra.mxu0 0.0
        %2092 = vmatprep.subr.mxu0 0.0
        %2093 = vmatpush1.msra.mxu0 0.0
        %2094 = vmatprep.subr.mxu0 0.0
        %2095 = vmatpush1.msra.mxu0 0.0
        %2096 = vmatprep.subr.mxu0 0.0
        %2097 = vmatpush1.msra.mxu0 0.0
        %2098 = vmatprep.subr.mxu0 0.0
        %2099 = vmatpush1.msra.mxu0 0.0
        %2100 = vmatprep.subr.mxu0 0.0
        %2101 = vmatpush1.msra.mxu0 0.0
        %2102 = vmatprep.subr.mxu0 %v2075
        %2103 = vmatpush1.msra.mxu0 %v2074
        %2104 = vmatprep.subr.mxu0 %v2071
        %2105 = vmatpush1.msra.mxu0 %v2070
        %2106 = vmatprep.subr.mxu0 %v2067
        %2107 = vmatpush1.msra.mxu0 %v2066
        %2108 = vmatprep.subr.mxu0 %v2063
        %2109 = vmatpush1.msra.mxu0 %v2062
        %2110 = vmatprep.subr.mxu0 0.0
        %2111 = vmatpush2.msra.mxu0 0.0
        %2112 = vmatprep.subr.mxu0 0.0
        %2113 = vmatpush2.msra.mxu0 0.0
        %2114 = vmatprep.subr.mxu0 0.0
        %2115 = vmatpush2.msra.mxu0 0.0
        %2116 = vmatprep.subr.mxu0 0.0
        %2117 = vmatpush2.msra.mxu0 0.0
        %2118 = vmatprep.subr.mxu0 0.0
        %2119 = vmatpush2.msra.mxu0 0.0
        %2120 = vmatprep.subr.mxu0 0.0
        %2121 = vmatpush2.msra.mxu0 0.0
        %2122 = vmatprep.subr.mxu0 0.0
        %2123 = vmatpush2.msra.mxu0 0.0
        %2124 = vmatprep.subr.mxu0 0.0
        %2125 = vmatpush2.msra.mxu0 0.0
        %2126 = vmatprep.subr.mxu0 0.0
        %2127 = vmatpush2.msra.mxu0 0.0
        %2128 = vmatprep.subr.mxu0 0.0
        %2129 = vmatpush2.msra.mxu0 0.0
        %2130 = vmatprep.subr.mxu0 0.0
        %2131 = vmatpush2.msra.mxu0 0.0
        %2132 = vmatprep.subr.mxu0 0.0
        %2133 = vmatpush2.msra.mxu0 0.0
        %2134 = vmatprep.subr.mxu0 0.0
        %2135 = vmatpush2.msra.mxu0 0.0
        %2136 = vmatprep.subr.mxu0 0.0
        %2137 = vmatpush2.msra.mxu0 0.0
        %2138 = vmatprep.subr.mxu0 0.0
        %2139 = vmatpush2.msra.mxu0 0.0
        %2140 = vmatprep.subr.mxu0 0.0
        %2141 = vmatpush2.msra.mxu0 0.0
        %2142 = vmatprep.mubr.f32.mxu0 0.0
        %2143 = vmatmul.mubr.f32.gmra.mxu0 %v826
        %v2144 = vpop.f32.mrf.mxu0
        %v2145 = vadd.f32 %v810, %v2144
        %v2146 = vpop.f32.mrf.mxu0
        %v2147 = vadd.f32 %v810, %v2146
        %2148 = vmatprep.mubr.f32.mxu0 0.0
        %2149 = vmatmul.mubr.f32.gmra.mxu0 %v829
        %v2150 = vpop.f32.mrf.mxu0
        %v2151 = vadd.f32 %v814, %v2150
        %v2152 = vpop.f32.mrf.mxu0
        %v2153 = vadd.f32 %v814, %v2152
        %2154 = vmatprep.mubr.f32.mxu0 0.0
        %2155 = vmatmul.mubr.f32.gmra.mxu0 %v832
        %v2156 = vpop.f32.mrf.mxu0
        %v2157 = vadd.f32 %v818, %v2156
        %v2158 = vpop.f32.mrf.mxu0
        %v2159 = vadd.f32 %v818, %v2158
        %2160 = vmatprep.mubr.f32.mxu0 0.0
        %2161 = vmatmul.mubr.f32.gmra.mxu0 %v835
        %v2162 = vpop.f32.mrf.mxu0
        %v2163 = vadd.f32 %v822, %v2162
        %v2164 = vpop.f32.mrf.mxu0
        %v2165 = vadd.f32 %v822, %v2164
        %2166 = vdwg.mxu0
        %2167 = vmatprep.subr.mxu0 0.0
        %2168 = vmatpush1.msra.mxu0 0.0
        %2169 = vmatprep.subr.mxu0 0.0
        %2170 = vmatpush1.msra.mxu0 0.0
        %2171 = vmatprep.subr.mxu0 0.0
        %2172 = vmatpush1.msra.mxu0 0.0
        %2173 = vmatprep.subr.mxu0 0.0
        %2174 = vmatpush1.msra.mxu0 0.0
        %2175 = vmatprep.subr.mxu0 0.0
        %2176 = vmatpush1.msra.mxu0 0.0
        %2177 = vmatprep.subr.mxu0 0.0
        %2178 = vmatpush1.msra.mxu0 0.0
        %2179 = vmatprep.subr.mxu0 0.0
        %2180 = vmatpush1.msra.mxu0 0.0
        %2181 = vmatprep.subr.mxu0 0.0
        %2182 = vmatpush1.msra.mxu0 0.0
        %2183 = vmatprep.subr.mxu0 0.0
        %2184 = vmatpush1.msra.mxu0 0.0
        %2185 = vmatprep.subr.mxu0 0.0
        %2186 = vmatpush1.msra.mxu0 0.0
        %2187 = vmatprep.subr.mxu0 0.0
        %2188 = vmatpush1.msra.mxu0 0.0
        %2189 = vmatprep.subr.mxu0 0.0
        %2190 = vmatpush1.msra.mxu0 0.0
        %2191 = vmatprep.subr.mxu0 %v2077
        %2192 = vmatpush1.msra.mxu0 %v2076
        %2193 = vmatprep.subr.mxu0 %v2073
        %2194 = vmatpush1.msra.mxu0 %v2072
        %2195 = vmatprep.subr.mxu0 %v2069
        %2196 = vmatpush1.msra.mxu0 %v2068
        %2197 = vmatprep.subr.mxu0 %v2065
        %2198 = vmatpush1.msra.mxu0 %v2064
        %2199 = vmatprep.subr.mxu0 0.0
        %2200 = vmatpush2.msra.mxu0 0.0
        %2201 = vmatprep.subr.mxu0 0.0
        %2202 = vmatpush2.msra.mxu0 0.0
        %2203 = vmatprep.subr.mxu0 0.0
        %2204 = vmatpush2.msra.mxu0 0.0
        %2205 = vmatprep.subr.mxu0 0.0
        %2206 = vmatpush2.msra.mxu0 0.0
        %2207 = vmatprep.subr.mxu0 0.0
        %2208 = vmatpush2.msra.mxu0 0.0
        %2209 = vmatprep.subr.mxu0 0.0
        %2210 = vmatpush2.msra.mxu0 0.0
        %2211 = vmatprep.subr.mxu0 0.0
        %2212 = vmatpush2.msra.mxu0 0.0
        %2213 = vmatprep.subr.mxu0 0.0
        %2214 = vmatpush2.msra.mxu0 0.0
        %2215 = vmatprep.subr.mxu0 0.0
        %2216 = vmatpush2.msra.mxu0 0.0
        %2217 = vmatprep.subr.mxu0 0.0
        %2218 = vmatpush2.msra.mxu0 0.0
        %2219 = vmatprep.subr.mxu0 0.0
        %2220 = vmatpush2.msra.mxu0 0.0
        %2221 = vmatprep.subr.mxu0 0.0
        %2222 = vmatpush2.msra.mxu0 0.0
        %2223 = vmatprep.subr.mxu0 0.0
        %2224 = vmatpush2.msra.mxu0 0.0
        %2225 = vmatprep.subr.mxu0 0.0
        %2226 = vmatpush2.msra.mxu0 0.0
        %2227 = vmatprep.subr.mxu0 0.0
        %2228 = vmatpush2.msra.mxu0 0.0
        %2229 = vmatprep.subr.mxu0 0.0
        %2230 = vmatpush2.msra.mxu0 0.0
        %2231 = vmatprep.mubr.f32.mxu0 0.0
        %2232 = vmatmul.mubr.f32.gmra.mxu0 %v826
        %v2233 = vpop.f32.mrf.mxu0
        %v2234 = vadd.f32 %v810, %v2233
        %v2235 = vpop.f32.mrf.mxu0
        %v2236 = vadd.f32 %v810, %v2235
        %2237 = vmatprep.mubr.f32.mxu0 0.0
        %2238 = vmatmul.mubr.f32.gmra.mxu0 %v829
        %v2239 = vpop.f32.mrf.mxu0
        %v2240 = vadd.f32 %v814, %v2239
        %v2241 = vpop.f32.mrf.mxu0
        %v2242 = vadd.f32 %v814, %v2241
        %2243 = vmatprep.mubr.f32.mxu0 0.0
        %2244 = vmatmul.mubr.f32.gmra.mxu0 %v832
        %v2245 = vpop.f32.mrf.mxu0
        %v2246 = vadd.f32 %v818, %v2245
        %v2247 = vpop.f32.mrf.mxu0
        %v2248 = vadd.f32 %v818, %v2247
        %2249 = vmatprep.mubr.f32.mxu0 0.0
        %2250 = vmatmul.mubr.f32.gmra.mxu0 %v835
        %v2251 = vpop.f32.mrf.mxu0
        %v2252 = vadd.f32 %v822, %v2251
        %v2253 = vpop.f32.mrf.mxu0
        %v2254 = vadd.f32 %v822, %v2253
        %2255 = vdwg.mxu0
        %v2256 = vmax.f32 %v2145, 0.0
        %v2257 = vmax.f32 %v2147, 0.0
        %v2258 = vmax.f32 %v2234, 0.0
        %v2259 = vmax.f32 %v2236, 0.0
        %v2260 = vmax.f32 %v2151, 0.0
        %v2261 = vmax.f32 %v2153, 0.0
        %v2262 = vmax.f32 %v2240, 0.0
        %v2263 = vmax.f32 %v2242, 0.0
        %v2264 = vmax.f32 %v2157, 0.0
        %v2265 = vmax.f32 %v2159, 0.0
        %v2266 = vmax.f32 %v2246, 0.0
        %v2267 = vmax.f32 %v2248, 0.0
        %v2268 = vmax.f32 %v2163, 0.0
        %v2269 = vmax.f32 %v2165, 0.0
        %v2270 = vmax.f32 %v2252, 0.0
        %v2271 = vmax.f32 %v2254, 0.0
        %2272 = vmatprep.subr.mxu0 0.0
        %2273 = vmatpush1.msra.mxu0 0.0
        %2274 = vmatprep.subr.mxu0 0.0
        %2275 = vmatpush1.msra.mxu0 0.0
        %2276 = vmatprep.subr.mxu0 0.0
        %2277 = vmatpush1.msra.mxu0 0.0
        %2278 = vmatprep.subr.mxu0 0.0
        %2279 = vmatpush1.msra.mxu0 0.0
        %2280 = vmatprep.subr.mxu0 0.0
        %2281 = vmatpush1.msra.mxu0 0.0
        %2282 = vmatprep.subr.mxu0 0.0
        %2283 = vmatpush1.msra.mxu0 0.0
        %2284 = vmatprep.subr.mxu0 0.0
        %2285 = vmatpush1.msra.mxu0 0.0
        %2286 = vmatprep.subr.mxu0 0.0
        %2287 = vmatpush1.msra.mxu0 0.0
        %2288 = vmatprep.subr.mxu0 0.0
        %2289 = vmatpush1.msra.mxu0 0.0
        %2290 = vmatprep.subr.mxu0 0.0
        %2291 = vmatpush1.msra.mxu0 0.0
        %2292 = vmatprep.subr.mxu0 0.0
        %2293 = vmatpush1.msra.mxu0 0.0
        %2294 = vmatprep.subr.mxu0 0.0
        %2295 = vmatpush1.msra.mxu0 0.0
        %2296 = vmatprep.subr.mxu0 %v2269
        %2297 = vmatpush1.msra.mxu0 %v2268
        %2298 = vmatprep.subr.mxu0 %v2265
        %2299 = vmatpush1.msra.mxu0 %v2264
        %2300 = vmatprep.subr.mxu0 %v2261
        %2301 = vmatpush1.msra.mxu0 %v2260
        %2302 = vmatprep.subr.mxu0 %v2257
        %2303 = vmatpush1.msra.mxu0 %v2256
        %2304 = vmatprep.subr.mxu0 0.0
        %2305 = vmatpush2.msra.mxu0 0.0
        %2306 = vmatprep.subr.mxu0 0.0
        %2307 = vmatpush2.msra.mxu0 0.0
        %2308 = vmatprep.subr.mxu0 0.0
        %2309 = vmatpush2.msra.mxu0 0.0
        %2310 = vmatprep.subr.mxu0 0.0
        %2311 = vmatpush2.msra.mxu0 0.0
        %2312 = vmatprep.subr.mxu0 0.0
        %2313 = vmatpush2.msra.mxu0 0.0
        %2314 = vmatprep.subr.mxu0 0.0
        %2315 = vmatpush2.msra.mxu0 0.0
        %2316 = vmatprep.subr.mxu0 0.0
        %2317 = vmatpush2.msra.mxu0 0.0
        %2318 = vmatprep.subr.mxu0 0.0
        %2319 = vmatpush2.msra.mxu0 0.0
        %2320 = vmatprep.subr.mxu0 0.0
        %2321 = vmatpush2.msra.mxu0 0.0
        %2322 = vmatprep.subr.mxu0 0.0
        %2323 = vmatpush2.msra.mxu0 0.0
        %2324 = vmatprep.subr.mxu0 0.0
        %2325 = vmatpush2.msra.mxu0 0.0
        %2326 = vmatprep.subr.mxu0 0.0
        %2327 = vmatpush2.msra.mxu0 0.0
        %2328 = vmatprep.subr.mxu0 0.0
        %2329 = vmatpush2.msra.mxu0 0.0
        %2330 = vmatprep.subr.mxu0 0.0
        %2331 = vmatpush2.msra.mxu0 0.0
        %2332 = vmatprep.subr.mxu0 0.0
        %2333 = vmatpush2.msra.mxu0 0.0
        %2334 = vmatprep.subr.mxu0 0.0
        %2335 = vmatpush2.msra.mxu0 0.0
        %2336 = vmatprep.mubr.f32.mxu0 0.0
        %2337 = vmatmul.mubr.f32.gmra.mxu0 %v1048
        %v2338 = vpop.f32.mrf.mxu0
        %v2339 = vadd.f32 %v1033, %v2338
        %v2340 = vpop.f32.mrf.mxu0
        %v2341 = vadd.f32 %v1033, %v2340
        %2342 = vmatprep.mubr.f32.mxu0 0.0
        %2343 = vmatmul.mubr.f32.gmra.mxu0 %v1051
        %v2344 = vpop.f32.mrf.mxu0
        %v2345 = vadd.f32 %v1037, %v2344
        %v2346 = vpop.f32.mrf.mxu0
        %v2347 = vadd.f32 %v1037, %v2346
        %2348 = vmatprep.mubr.f32.mxu0 0.0
        %2349 = vmatmul.mubr.f32.gmra.mxu0 %v1054
        %v2350 = vpop.f32.mrf.mxu0
        %v2351 = vadd.f32 %v1041, %v2350
        %v2352 = vpop.f32.mrf.mxu0
        %v2353 = vadd.f32 %v1041, %v2352
        %2354 = vmatprep.mubr.f32.mxu0 0.0
        %2355 = vmatmul.mubr.f32.gmra.mxu0 %v1057
        %v2356 = vpop.f32.mrf.mxu0
        %v2357 = vadd.f32 %v1045, %v2356
        %v2358 = vpop.f32.mrf.mxu0
        %v2359 = vadd.f32 %v1045, %v2358
        %2360 = vdwg.mxu0
        %2361 = vmatprep.subr.mxu0 0.0
        %2362 = vmatpush1.msra.mxu0 0.0
        %2363 = vmatprep.subr.mxu0 0.0
        %2364 = vmatpush1.msra.mxu0 0.0
        %2365 = vmatprep.subr.mxu0 0.0
        %2366 = vmatpush1.msra.mxu0 0.0
        %2367 = vmatprep.subr.mxu0 0.0
        %2368 = vmatpush1.msra.mxu0 0.0
        %2369 = vmatprep.subr.mxu0 0.0
        %2370 = vmatpush1.msra.mxu0 0.0
        %2371 = vmatprep.subr.mxu0 0.0
        %2372 = vmatpush1.msra.mxu0 0.0
        %2373 = vmatprep.subr.mxu0 0.0
        %2374 = vmatpush1.msra.mxu0 0.0
        %2375 = vmatprep.subr.mxu0 0.0
        %2376 = vmatpush1.msra.mxu0 0.0
        %2377 = vmatprep.subr.mxu0 0.0
        %2378 = vmatpush1.msra.mxu0 0.0
        %2379 = vmatprep.subr.mxu0 0.0
        %2380 = vmatpush1.msra.mxu0 0.0
        %2381 = vmatprep.subr.mxu0 0.0
        %2382 = vmatpush1.msra.mxu0 0.0
        %2383 = vmatprep.subr.mxu0 0.0
        %2384 = vmatpush1.msra.mxu0 0.0
        %2385 = vmatprep.subr.mxu0 %v2271
        %2386 = vmatpush1.msra.mxu0 %v2270
        %2387 = vmatprep.subr.mxu0 %v2267
        %2388 = vmatpush1.msra.mxu0 %v2266
        %2389 = vmatprep.subr.mxu0 %v2263
        %2390 = vmatpush1.msra.mxu0 %v2262
        %2391 = vmatprep.subr.mxu0 %v2259
        %2392 = vmatpush1.msra.mxu0 %v2258
        %2393 = vmatprep.subr.mxu0 0.0
        %2394 = vmatpush2.msra.mxu0 0.0
        %2395 = vmatprep.subr.mxu0 0.0
        %2396 = vmatpush2.msra.mxu0 0.0
        %2397 = vmatprep.subr.mxu0 0.0
        %2398 = vmatpush2.msra.mxu0 0.0
        %2399 = vmatprep.subr.mxu0 0.0
        %2400 = vmatpush2.msra.mxu0 0.0
        %2401 = vmatprep.subr.mxu0 0.0
        %2402 = vmatpush2.msra.mxu0 0.0
        %2403 = vmatprep.subr.mxu0 0.0
        %2404 = vmatpush2.msra.mxu0 0.0
        %2405 = vmatprep.subr.mxu0 0.0
        %2406 = vmatpush2.msra.mxu0 0.0
        %2407 = vmatprep.subr.mxu0 0.0
        %2408 = vmatpush2.msra.mxu0 0.0
        %2409 = vmatprep.subr.mxu0 0.0
        %2410 = vmatpush2.msra.mxu0 0.0
        %2411 = vmatprep.subr.mxu0 0.0
        %2412 = vmatpush2.msra.mxu0 0.0
        %2413 = vmatprep.subr.mxu0 0.0
        %2414 = vmatpush2.msra.mxu0 0.0
        %2415 = vmatprep.subr.mxu0 0.0
        %2416 = vmatpush2.msra.mxu0 0.0
        %2417 = vmatprep.subr.mxu0 0.0
        %2418 = vmatpush2.msra.mxu0 0.0
        %2419 = vmatprep.subr.mxu0 0.0
        %2420 = vmatpush2.msra.mxu0 0.0
        %2421 = vmatprep.subr.mxu0 0.0
        %2422 = vmatpush2.msra.mxu0 0.0
        %2423 = vmatprep.subr.mxu0 0.0
        %2424 = vmatpush2.msra.mxu0 0.0
        %2425 = vmatprep.mubr.f32.mxu0 0.0
        %2426 = vmatmul.mubr.f32.gmra.mxu0 %v1048
        %v2427 = vpop.f32.mrf.mxu0
        %v2428 = vadd.f32 %v1033, %v2427
        %v2429 = vpop.f32.mrf.mxu0
        %v2430 = vadd.f32 %v1033, %v2429
        %2431 = vmatprep.mubr.f32.mxu0 0.0
        %2432 = vmatmul.mubr.f32.gmra.mxu0 %v1051
        %v2433 = vpop.f32.mrf.mxu0
        %v2434 = vadd.f32 %v1037, %v2433
        %v2435 = vpop.f32.mrf.mxu0
        %v2436 = vadd.f32 %v1037, %v2435
        %2437 = vmatprep.mubr.f32.mxu0 0.0
        %2438 = vmatmul.mubr.f32.gmra.mxu0 %v1054
        %v2439 = vpop.f32.mrf.mxu0
        %v2440 = vadd.f32 %v1041, %v2439
        %v2441 = vpop.f32.mrf.mxu0
        %v2442 = vadd.f32 %v1041, %v2441
        %2443 = vmatprep.mubr.f32.mxu0 0.0
        %2444 = vmatmul.mubr.f32.gmra.mxu0 %v1057
        %v2445 = vpop.f32.mrf.mxu0
        %v2446 = vadd.f32 %v1045, %v2445
        %v2447 = vpop.f32.mrf.mxu0
        %v2448 = vadd.f32 %v1045, %v2447
        %2449 = vdwg.mxu0
        %v2450 = vmax.f32 %v2339, 0.0
        %v2451 = vmax.f32 %v2341, 0.0
        %v2452 = vmax.f32 %v2428, 0.0
        %v2453 = vmax.f32 %v2430, 0.0
        %v2454 = vmax.f32 %v2345, 0.0
        %v2455 = vmax.f32 %v2347, 0.0
        %v2456 = vmax.f32 %v2434, 0.0
        %v2457 = vmax.f32 %v2436, 0.0
        %v2458 = vmax.f32 %v2351, 0.0
        %v2459 = vmax.f32 %v2353, 0.0
        %v2460 = vmax.f32 %v2440, 0.0
        %v2461 = vmax.f32 %v2442, 0.0
        %v2462 = vmax.f32 %v2357, 0.0
        %v2463 = vmax.f32 %v2359, 0.0
        %v2464 = vmax.f32 %v2446, 0.0
        %v2465 = vmax.f32 %v2448, 0.0
        %2466 = vmatprep.subr.mxu0 0.0
        %2467 = vmatpush1.msra.mxu0 0.0
        %2468 = vmatprep.subr.mxu0 0.0
        %2469 = vmatpush1.msra.mxu0 0.0
        %2470 = vmatprep.subr.mxu0 0.0
        %2471 = vmatpush1.msra.mxu0 0.0
        %2472 = vmatprep.subr.mxu0 0.0
        %2473 = vmatpush1.msra.mxu0 0.0
        %2474 = vmatprep.subr.mxu0 0.0
        %2475 = vmatpush1.msra.mxu0 0.0
        %2476 = vmatprep.subr.mxu0 0.0
        %2477 = vmatpush1.msra.mxu0 0.0
        %2478 = vmatprep.subr.mxu0 0.0
        %2479 = vmatpush1.msra.mxu0 0.0
        %2480 = vmatprep.subr.mxu0 0.0
        %2481 = vmatpush1.msra.mxu0 0.0
        %2482 = vmatprep.subr.mxu0 0.0
        %2483 = vmatpush1.msra.mxu0 0.0
        %2484 = vmatprep.subr.mxu0 0.0
        %2485 = vmatpush1.msra.mxu0 0.0
        %2486 = vmatprep.subr.mxu0 0.0
        %2487 = vmatpush1.msra.mxu0 0.0
        %2488 = vmatprep.subr.mxu0 0.0
        %2489 = vmatpush1.msra.mxu0 0.0
        %2490 = vmatprep.subr.mxu0 %v2463
        %2491 = vmatpush1.msra.mxu0 %v2462
        %2492 = vmatprep.subr.mxu0 %v2459
        %2493 = vmatpush1.msra.mxu0 %v2458
        %2494 = vmatprep.subr.mxu0 %v2455
        %2495 = vmatpush1.msra.mxu0 %v2454
        %2496 = vmatprep.subr.mxu0 %v2451
        %2497 = vmatpush1.msra.mxu0 %v2450
        %2498 = vmatprep.subr.mxu0 0.0
        %2499 = vmatpush2.msra.mxu0 0.0
        %2500 = vmatprep.subr.mxu0 0.0
        %2501 = vmatpush2.msra.mxu0 0.0
        %2502 = vmatprep.subr.mxu0 0.0
        %2503 = vmatpush2.msra.mxu0 0.0
        %2504 = vmatprep.subr.mxu0 0.0
        %2505 = vmatpush2.msra.mxu0 0.0
        %2506 = vmatprep.subr.mxu0 0.0
        %2507 = vmatpush2.msra.mxu0 0.0
        %2508 = vmatprep.subr.mxu0 0.0
        %2509 = vmatpush2.msra.mxu0 0.0
        %2510 = vmatprep.subr.mxu0 0.0
        %2511 = vmatpush2.msra.mxu0 0.0
        %2512 = vmatprep.subr.mxu0 0.0
        %2513 = vmatpush2.msra.mxu0 0.0
        %2514 = vmatprep.subr.mxu0 0.0
        %2515 = vmatpush2.msra.mxu0 0.0
        %2516 = vmatprep.subr.mxu0 0.0
        %2517 = vmatpush2.msra.mxu0 0.0
        %2518 = vmatprep.subr.mxu0 0.0
        %2519 = vmatpush2.msra.mxu0 0.0
        %2520 = vmatprep.subr.mxu0 0.0
        %2521 = vmatpush2.msra.mxu0 0.0
        %2522 = vmatprep.subr.mxu0 0.0
        %2523 = vmatpush2.msra.mxu0 0.0
        %2524 = vmatprep.subr.mxu0 0.0
        %2525 = vmatpush2.msra.mxu0 0.0
        %2526 = vmatprep.subr.mxu0 0.0
        %2527 = vmatpush2.msra.mxu0 0.0
        %2528 = vmatprep.subr.mxu0 0.0
        %2529 = vmatpush2.msra.mxu0 0.0
        %2530 = vmatprep.mubr.f32.mxu0 0.0
        %2531 = vmatmul.mubr.f32.gmra.mxu0 %v1270
        %v2532 = vpop.f32.mrf.mxu0
        %v2533 = vadd.f32 %v1255, %v2532
        %v2534 = vpop.f32.mrf.mxu0
        %v2535 = vadd.f32 %v1255, %v2534
        %2536 = vmatprep.mubr.f32.mxu0 0.0
        %2537 = vmatmul.mubr.f32.gmra.mxu0 %v1273
        %v2538 = vpop.f32.mrf.mxu0
        %v2539 = vadd.f32 %v1259, %v2538
        %v2540 = vpop.f32.mrf.mxu0
        %v2541 = vadd.f32 %v1259, %v2540
        %2542 = vmatprep.mubr.f32.mxu0 0.0
        %2543 = vmatmul.mubr.f32.gmra.mxu0 %v1276
        %v2544 = vpop.f32.mrf.mxu0
        %v2545 = vadd.f32 %v1263, %v2544
        %v2546 = vpop.f32.mrf.mxu0
        %v2547 = vadd.f32 %v1263, %v2546
        %2548 = vmatprep.mubr.f32.mxu0 0.0
        %2549 = vmatmul.mubr.f32.gmra.mxu0 %v1279
        %v2550 = vpop.f32.mrf.mxu0
        %v2551 = vadd.f32 %v1267, %v2550
        %v2552 = vpop.f32.mrf.mxu0
        %v2553 = vadd.f32 %v1267, %v2552
        %2554 = vdwg.mxu0
        %2555 = vmatprep.subr.mxu0 0.0
        %2556 = vmatpush1.msra.mxu0 0.0
        %2557 = vmatprep.subr.mxu0 0.0
        %2558 = vmatpush1.msra.mxu0 0.0
        %2559 = vmatprep.subr.mxu0 0.0
        %2560 = vmatpush1.msra.mxu0 0.0
        %2561 = vmatprep.subr.mxu0 0.0
        %2562 = vmatpush1.msra.mxu0 0.0
        %2563 = vmatprep.subr.mxu0 0.0
        %2564 = vmatpush1.msra.mxu0 0.0
        %2565 = vmatprep.subr.mxu0 0.0
        %2566 = vmatpush1.msra.mxu0 0.0
        %2567 = vmatprep.subr.mxu0 0.0
        %2568 = vmatpush1.msra.mxu0 0.0
        %2569 = vmatprep.subr.mxu0 0.0
        %2570 = vmatpush1.msra.mxu0 0.0
        %2571 = vmatprep.subr.mxu0 0.0
        %2572 = vmatpush1.msra.mxu0 0.0
        %2573 = vmatprep.subr.mxu0 0.0
        %2574 = vmatpush1.msra.mxu0 0.0
        %2575 = vmatprep.subr.mxu0 0.0
        %2576 = vmatpush1.msra.mxu0 0.0
        %2577 = vmatprep.subr.mxu0 0.0
        %2578 = vmatpush1.msra.mxu0 0.0
        %2579 = vmatprep.subr.mxu0 %v2465
        %2580 = vmatpush1.msra.mxu0 %v2464
        %2581 = vmatprep.subr.mxu0 %v2461
        %2582 = vmatpush1.msra.mxu0 %v2460
        %2583 = vmatprep.subr.mxu0 %v2457
        %2584 = vmatpush1.msra.mxu0 %v2456
        %2585 = vmatprep.subr.mxu0 %v2453
        %2586 = vmatpush1.msra.mxu0 %v2452
        %2587 = vmatprep.subr.mxu0 0.0
        %2588 = vmatpush2.msra.mxu0 0.0
        %2589 = vmatprep.subr.mxu0 0.0
        %2590 = vmatpush2.msra.mxu0 0.0
        %2591 = vmatprep.subr.mxu0 0.0
        %2592 = vmatpush2.msra.mxu0 0.0
        %2593 = vmatprep.subr.mxu0 0.0
        %2594 = vmatpush2.msra.mxu0 0.0
        %2595 = vmatprep.subr.mxu0 0.0
        %2596 = vmatpush2.msra.mxu0 0.0
        %2597 = vmatprep.subr.mxu0 0.0
        %2598 = vmatpush2.msra.mxu0 0.0
        %2599 = vmatprep.subr.mxu0 0.0
        %2600 = vmatpush2.msra.mxu0 0.0
        %2601 = vmatprep.subr.mxu0 0.0
        %2602 = vmatpush2.msra.mxu0 0.0
        %2603 = vmatprep.subr.mxu0 0.0
        %2604 = vmatpush2.msra.mxu0 0.0
        %2605 = vmatprep.subr.mxu0 0.0
        %2606 = vmatpush2.msra.mxu0 0.0
        %2607 = vmatprep.subr.mxu0 0.0
        %2608 = vmatpush2.msra.mxu0 0.0
        %2609 = vmatprep.subr.mxu0 0.0
        %2610 = vmatpush2.msra.mxu0 0.0
        %2611 = vmatprep.subr.mxu0 0.0
        %2612 = vmatpush2.msra.mxu0 0.0
        %2613 = vmatprep.subr.mxu0 0.0
        %2614 = vmatpush2.msra.mxu0 0.0
        %2615 = vmatprep.subr.mxu0 0.0
        %2616 = vmatpush2.msra.mxu0 0.0
        %2617 = vmatprep.subr.mxu0 0.0
        %2618 = vmatpush2.msra.mxu0 0.0
        %2619 = vmatprep.mubr.f32.mxu0 0.0
        %2620 = vmatmul.mubr.f32.gmra.mxu0 %v1270
        %v2621 = vpop.f32.mrf.mxu0
        %v2622 = vadd.f32 %v1255, %v2621
        %v2623 = vpop.f32.mrf.mxu0
        %v2624 = vadd.f32 %v1255, %v2623
        %2625 = vmatprep.mubr.f32.mxu0 0.0
        %2626 = vmatmul.mubr.f32.gmra.mxu0 %v1273
        %v2627 = vpop.f32.mrf.mxu0
        %v2628 = vadd.f32 %v1259, %v2627
        %v2629 = vpop.f32.mrf.mxu0
        %v2630 = vadd.f32 %v1259, %v2629
        %2631 = vmatprep.mubr.f32.mxu0 0.0
        %2632 = vmatmul.mubr.f32.gmra.mxu0 %v1276
        %v2633 = vpop.f32.mrf.mxu0
        %v2634 = vadd.f32 %v1263, %v2633
        %v2635 = vpop.f32.mrf.mxu0
        %v2636 = vadd.f32 %v1263, %v2635
        %2637 = vmatprep.mubr.f32.mxu0 0.0
        %2638 = vmatmul.mubr.f32.gmra.mxu0 %v1279
        %v2639 = vpop.f32.mrf.mxu0
        %v2640 = vadd.f32 %v1267, %v2639
        %v2641 = vpop.f32.mrf.mxu0
        %v2642 = vadd.f32 %v1267, %v2641
        %2643 = vdwg.mxu0
        %v2644 = vmax.f32 %v2533, 0.0
        %v2645 = vmax.f32 %v2535, 0.0
        %v2646 = vmax.f32 %v2622, 0.0
        %v2647 = vmax.f32 %v2624, 0.0
        %v2648 = vmax.f32 %v2539, 0.0
        %v2649 = vmax.f32 %v2541, 0.0
        %v2650 = vmax.f32 %v2628, 0.0
        %v2651 = vmax.f32 %v2630, 0.0
        %v2652 = vmax.f32 %v2545, 0.0
        %v2653 = vmax.f32 %v2547, 0.0
        %v2654 = vmax.f32 %v2634, 0.0
        %v2655 = vmax.f32 %v2636, 0.0
        %v2656 = vmax.f32 %v2551, 0.0
        %v2657 = vmax.f32 %v2553, 0.0
        %v2658 = vmax.f32 %v2640, 0.0
        %v2659 = vmax.f32 %v2642, 0.0
        %2660 = vmatprep.subr.mxu0 0.0
        %2661 = vmatpush1.msra.mxu0 0.0
        %2662 = vmatprep.subr.mxu0 0.0
        %2663 = vmatpush1.msra.mxu0 0.0
        %2664 = vmatprep.subr.mxu0 0.0
        %2665 = vmatpush1.msra.mxu0 0.0
        %2666 = vmatprep.subr.mxu0 0.0
        %2667 = vmatpush1.msra.mxu0 0.0
        %2668 = vmatprep.subr.mxu0 0.0
        %2669 = vmatpush1.msra.mxu0 0.0
        %2670 = vmatprep.subr.mxu0 0.0
        %2671 = vmatpush1.msra.mxu0 0.0
        %2672 = vmatprep.subr.mxu0 0.0
        %2673 = vmatpush1.msra.mxu0 0.0
        %2674 = vmatprep.subr.mxu0 0.0
        %2675 = vmatpush1.msra.mxu0 0.0
        %2676 = vmatprep.subr.mxu0 0.0
        %2677 = vmatpush1.msra.mxu0 0.0
        %2678 = vmatprep.subr.mxu0 0.0
        %2679 = vmatpush1.msra.mxu0 0.0
        %2680 = vmatprep.subr.mxu0 0.0
        %2681 = vmatpush1.msra.mxu0 0.0
        %2682 = vmatprep.subr.mxu0 0.0
        %2683 = vmatpush1.msra.mxu0 0.0
        %2684 = vmatprep.subr.mxu0 %v2657
        %2685 = vmatpush1.msra.mxu0 %v2656
        %2686 = vmatprep.subr.mxu0 %v2653
        %2687 = vmatpush1.msra.mxu0 %v2652
        %2688 = vmatprep.subr.mxu0 %v2649
        %2689 = vmatpush1.msra.mxu0 %v2648
        %2690 = vmatprep.subr.mxu0 %v2645
        %2691 = vmatpush1.msra.mxu0 %v2644
        %2692 = vmatprep.subr.mxu0 0.0
        %2693 = vmatpush2.msra.mxu0 0.0
        %2694 = vmatprep.subr.mxu0 0.0
        %2695 = vmatpush2.msra.mxu0 0.0
        %2696 = vmatprep.subr.mxu0 0.0
        %2697 = vmatpush2.msra.mxu0 0.0
        %2698 = vmatprep.subr.mxu0 0.0
        %2699 = vmatpush2.msra.mxu0 0.0
        %2700 = vmatprep.subr.mxu0 0.0
        %2701 = vmatpush2.msra.mxu0 0.0
        %2702 = vmatprep.subr.mxu0 0.0
        %2703 = vmatpush2.msra.mxu0 0.0
        %2704 = vmatprep.subr.mxu0 0.0
        %2705 = vmatpush2.msra.mxu0 0.0
        %2706 = vmatprep.subr.mxu0 0.0
        %2707 = vmatpush2.msra.mxu0 0.0
        %2708 = vmatprep.subr.mxu0 0.0
        %2709 = vmatpush2.msra.mxu0 0.0
        %2710 = vmatprep.subr.mxu0 0.0
        %2711 = vmatpush2.msra.mxu0 0.0
        %2712 = vmatprep.subr.mxu0 0.0
        %2713 = vmatpush2.msra.mxu0 0.0
        %2714 = vmatprep.subr.mxu0 0.0
        %2715 = vmatpush2.msra.mxu0 0.0
        %2716 = vmatprep.subr.mxu0 0.0
        %2717 = vmatpush2.msra.mxu0 0.0
        %2718 = vmatprep.subr.mxu0 0.0
        %2719 = vmatpush2.msra.mxu0 0.0
        %2720 = vmatprep.subr.mxu0 0.0
        %2721 = vmatpush2.msra.mxu0 0.0
        %2722 = vmatprep.subr.mxu0 0.0
        %2723 = vmatpush2.msra.mxu0 0.0
        %2724 = vmatprep.mubr.f32.mxu0 0.0
        %2725 = vmatmul.mubr.f32.gmra.mxu0 %v1480
        %v2726 = vpop.f32.mrf.mxu0
        %v2727 = vadd.f32 %v1477, %v2726
        %v2728 = vpop.f32.mrf.mxu0
        %v2729 = vadd.f32 %v1477, %v2728
        %2730 = vdwg.mxu0
        %2731 = vmatprep.subr.mxu0 0.0
        %2732 = vmatpush1.msra.mxu0 0.0
        %2733 = vmatprep.subr.mxu0 0.0
        %2734 = vmatpush1.msra.mxu0 0.0
        %2735 = vmatprep.subr.mxu0 0.0
        %2736 = vmatpush1.msra.mxu0 0.0
        %2737 = vmatprep.subr.mxu0 0.0
        %2738 = vmatpush1.msra.mxu0 0.0
        %2739 = vmatprep.subr.mxu0 0.0
        %2740 = vmatpush1.msra.mxu0 0.0
        %2741 = vmatprep.subr.mxu0 0.0
        %2742 = vmatpush1.msra.mxu0 0.0
        %2743 = vmatprep.subr.mxu0 0.0
        %2744 = vmatpush1.msra.mxu0 0.0
        %2745 = vmatprep.subr.mxu0 0.0
        %2746 = vmatpush1.msra.mxu0 0.0
        %2747 = vmatprep.subr.mxu0 0.0
        %2748 = vmatpush1.msra.mxu0 0.0
        %2749 = vmatprep.subr.mxu0 0.0
        %2750 = vmatpush1.msra.mxu0 0.0
        %2751 = vmatprep.subr.mxu0 0.0
        %2752 = vmatpush1.msra.mxu0 0.0
        %2753 = vmatprep.subr.mxu0 0.0
        %2754 = vmatpush1.msra.mxu0 0.0
        %2755 = vmatprep.subr.mxu0 %v2659
        %2756 = vmatpush1.msra.mxu0 %v2658
        %2757 = vmatprep.subr.mxu0 %v2655
        %2758 = vmatpush1.msra.mxu0 %v2654
        %2759 = vmatprep.subr.mxu0 %v2651
        %2760 = vmatpush1.msra.mxu0 %v2650
        %2761 = vmatprep.subr.mxu0 %v2647
        %2762 = vmatpush1.msra.mxu0 %v2646
        %2763 = vmatprep.subr.mxu0 0.0
        %2764 = vmatpush2.msra.mxu0 0.0
        %2765 = vmatprep.subr.mxu0 0.0
        %2766 = vmatpush2.msra.mxu0 0.0
        %2767 = vmatprep.subr.mxu0 0.0
        %2768 = vmatpush2.msra.mxu0 0.0
        %2769 = vmatprep.subr.mxu0 0.0
        %2770 = vmatpush2.msra.mxu0 0.0
        %2771 = vmatprep.subr.mxu0 0.0
        %2772 = vmatpush2.msra.mxu0 0.0
        %2773 = vmatprep.subr.mxu0 0.0
        %2774 = vmatpush2.msra.mxu0 0.0
        %2775 = vmatprep.subr.mxu0 0.0
        %2776 = vmatpush2.msra.mxu0 0.0
        %2777 = vmatprep.subr.mxu0 0.0
        %2778 = vmatpush2.msra.mxu0 0.0
        %2779 = vmatprep.subr.mxu0 0.0
        %2780 = vmatpush2.msra.mxu0 0.0
        %2781 = vmatprep.subr.mxu0 0.0
        %2782 = vmatpush2.msra.mxu0 0.0
        %2783 = vmatprep.subr.mxu0 0.0
        %2784 = vmatpush2.msra.mxu0 0.0
        %2785 = vmatprep.subr.mxu0 0.0
        %2786 = vmatpush2.msra.mxu0 0.0
        %2787 = vmatprep.subr.mxu0 0.0
        %2788 = vmatpush2.msra.mxu0 0.0
        %2789 = vmatprep.subr.mxu0 0.0
        %2790 = vmatpush2.msra.mxu0 0.0
        %2791 = vmatprep.subr.mxu0 0.0
        %2792 = vmatpush2.msra.mxu0 0.0
        %2793 = vmatprep.subr.mxu0 0.0
        %2794 = vmatpush2.msra.mxu0 0.0
        %2795 = vmatprep.mubr.f32.mxu0 0.0
        %2796 = vmatmul.mubr.f32.gmra.mxu0 %v1480
        %v2797 = vpop.f32.mrf.mxu0
        %v2798 = vadd.f32 %v1477, %v2797
        %v2799 = vpop.f32.mrf.mxu0
        %v2800 = vadd.f32 %v1477, %v2799
        %2801 = vdwg.mxu0
        %2802 = vst [vmem:[%s284 + $0x20] sm:$0xff] %v2727
        %2803 = vst [vmem:[%s284 + $0x28] sm:$0xff] %v2729
        %2804 = vst [vmem:[%s284 + $0x30] sm:$0xff] %v2798
        %2805 = vst [vmem:[%s284 + $0x38] sm:$0xff] %v2800
        %s2806 = sand.u32 %s181, 1
        %s2807 = scalar_lea.sflag [#allocation3], %s2806
        %s2808 = sand.u32 %s181, 1
        %s2809 = smul.addr %s2808, 64
        %s2810 = scalar_lea.vmem [#allocation2], %s2809
        // Predicated region
        $region49: #{tpu_custom_call.1} parent=47 // pred_check
          %p2811 = pneg %p191
        $region50: #{tpu_custom_call.1} parent=47 // pred_check_branch
          %2813 = sbr.rel (%p2811) target = $region52
        $region51: #{tpu_custom_call.1} parent=47 // pred_region
          %s2814 = smul.u32 8, %s21
          %s2815 = ssub.s32 10, %s2814
          %p2816 = scmp.lt.s32.totalorder %s2815, 8
          %s2817 = scalar_select %p2816, %s2815, 8
          %s2818 = smul.u32 128, %s2817
          %s2820 = ssub.s32 1024, %s2818
          %2821 = vsyncadd %s2807, %s2820
          %p2822 = scmp.ne.s32.totalorder 0, %s2818
          %s2823 = smul.addr %s2814, 128
          %s2824 = scalar_lea.hbm %s7, %s2823
          %s2825 = smul.u32 %s2817, 8
          %s2826 = sshll.u32 %s2825, 4
          %s2827 = sshll.u32 %s2810, 4
          %s2828 = int_to_ptr.vmem [resolvable:$true] %s2827
          %2830 = dma.vmem_to_hbm [thread:$0]  (%p2822), %s2828, %s2826, %s2824, %s2807
        $region52: #{tpu_custom_call.1} parent=47 // pred_fallthru
          _
      $region48: #{tpu_custom_call.1} parent=5 // pred_fallthru
        _
      %p2831 = scmp.le.s32.totalorder 2, %s16
      // Predicated region
      $region53: #{tpu_custom_call.1} parent=5 // pred_check
        %p2832 = pneg %p2831
      $region54: #{tpu_custom_call.1} parent=5 // pred_check_branch
        %2834 = sbr.rel (%p2832) target = $region56
      $region55: #{tpu_custom_call.1} parent=5 // pred_region
        %s2835 = ssub.s32 %s16, 2
        // Predicated region
        $region57: #{tpu_custom_call.1} parent=55 // pred_check
          %p2836 = pneg %p197
        $region58: #{tpu_custom_call.1} parent=55 // pred_check_branch
          %2838 = sbr.rel (%p2836) target = $region60
        $region59: #{tpu_custom_call.1} parent=55 // pred_region
          %s2839 = sand.u32 %s182, 1
          %s2840 = scalar_lea.sflag [#allocation3], %s2839
          %s2841 = sand.u32 %s182, 1
          %s2842 = smul.addr %s2841, 64
          %s2843 = scalar_lea.vmem [#allocation2], %s2842
          %2844 = dma.done %s2840, 1024
        $region60: #{tpu_custom_call.1} parent=55 // pred_fallthru
          _
      $region56: #{tpu_custom_call.1} parent=5 // pred_fallthru
        _
    $region6: #{tpu_custom_call.1} parent=1 // loop_footer
      %s20 = sadd.s32 1, %s16
    $region7: #{tpu_custom_call.1} parent=1 // loop_footer_branch
      %15 = sbr.rel target = $region3
    $region8: #{tpu_custom_call.1} parent=1 // loop_exit
      _
    %2845 = vsyncpa [#allocation3], 1
    %s2846 = scalar_lea.sflag [#allocation3], 1
    %2847 = vsyncpa %s2846, 1

</llo_original>
